<compile_context>
chip_gen: v7x
topology: tpu7x:2x2x1
jax: 0.10.0
libtpu: 0.0.40
codegen_flags: <defaults>
</compile_context>

<pallas_src>
import jax
import jax.numpy as jnp
from jax.experimental import pallas as pl
from jax.experimental.pallas import tpu as pltpu


class Config:
    embedding_size = 32
    hidden_size = 32
    n_layers = 1          # single bidirectional LSTM layer
    drop_prob = 0.0       # dropout is identity in eval mode


def rcnn_kernel(x_ref, w_in_ref, whh_ref, w_head_ref, w_fc_ref, out_ref):
    T, B, E = x_ref.shape
    H = whh_ref.shape[0]
    G = 4 * H

    # unpack the packed weight slabs (each load happens exactly once)
    w_in = w_in_ref[:E, :]            # (E, 9H)  = [wih_f | wih_b | w_lin_x_rows]
    b_in = w_in_ref[E:E + 1, :]       # (1, 9H)  = [b_f   | b_b   | b_lin       ]
    whh_f = whh_ref[:, :G]            # (H, 4H)
    whh_b = whh_ref[:, G:]            # (H, 4H)
    w1 = w_head_ref[:H, :]            # (H, H)   multiplies h_fwd
    w2 = w_head_ref[H:, :]            # (H, H)   multiplies h_bwd
    w_fc = w_fc_ref[:H, :]            # (H, O)
    b_fc = w_fc_ref[H:H + 1, :]       # (1, O)

    # --- hoisted, batched input projection (both directions + head x-term + all biases) ---
    x_flat = x_ref[...].reshape(T * B, E)
    proj = jnp.dot(x_flat, w_in, preferred_element_type=jnp.float32) + b_in    # (T*B, 9H)

    def cell(gates, c):
        # gates: (B, 4H) pre-activations, PyTorch gate order (i, f, g, o)
        sg = jax.nn.sigmoid(gates)                       # single full-width EUP launch
        i = sg[:, 0:H]
        f = sg[:, H:2 * H]
        o = sg[:, 3 * H:4 * H]
        g = jnp.tanh(gates[:, 2 * H:3 * H])
        c_new = f * c + i * g
        return o * jnp.tanh(c_new), c_new

    zeros = jnp.zeros((B, H), jnp.float32)
    h_f, c_f, h_b, c_b = zeros, zeros, zeros, zeros
    hs_f = [None] * T
    hs_b = [None] * T

    # --- fused, fully-unrolled bidirectional recurrence: only h @ W_hh on the serial path ---
    for s in range(T):
        tf, tb = s, T - 1 - s
        gf = proj[tf * B:(tf + 1) * B, 0:G] + jnp.dot(
            h_f, whh_f, preferred_element_type=jnp.float32)
        gb = proj[tb * B:(tb + 1) * B, G:2 * G] + jnp.dot(
            h_b, whh_b, preferred_element_type=jnp.float32)
        h_f, c_f = cell(gf, c_f)
        h_b, c_b = cell(gb, c_b)
        hs_f[tf] = h_f
        hs_b[tb] = h_b

    # --- head: tanh(W @ [h_f, h_b, x] + b) batched over all T*B rows, then max over time ---
    hf_all = jnp.concatenate(hs_f, axis=0)               # (T*B, H)
    hb_all = jnp.concatenate(hs_b, axis=0)               # (T*B, H)
    z = jnp.tanh(jnp.dot(hf_all, w1, preferred_element_type=jnp.float32)
                 + jnp.dot(hb_all, w2, preferred_element_type=jnp.float32)
                 + proj[:, 2 * G:])                      # x@W3 + b_lin already precomputed
    m = jnp.max(z.reshape(T, B, H), axis=0)              # (B, H) == max_pool1d over length T

    # TODO(synk): nn.Dropout(drop_prob=0.0) is identity at inference time; not applied.
    logits = jnp.dot(m, w_fc, preferred_element_type=jnp.float32) + b_fc       # (B, O)
    shifted = logits - jnp.max(logits, axis=1, keepdims=True)
    lse = jnp.log(jnp.sum(jnp.exp(shifted), axis=1, keepdims=True))
    out_ref[...] = shifted - lse                         # LogSoftmax(dim=1)


def rcnn_forward(x_bte, params):
    """x_bte: (B, T, E) batch-first like PyTorch; params stored in (in, out) layout."""
    B, T, E = x_bte.shape
    H = Config.hidden_size
    O = params["w_fc"].shape[1]

    x_tbe = jnp.transpose(x_bte, (1, 0, 2))              # batch-first -> time-major

    # host-side packing: 10 small weight/bias arrays -> 4 slabs (fewer tiny HBM->VMEM DMAs)
    w_lin = params["w_lin"]                               # (2H + E, H), rows: [h_f | h_b | x]
    w_in_b = jnp.concatenate(
        [jnp.concatenate([params["wih_f"], params["wih_b"], w_lin[2 * H:]], axis=1),
         jnp.concatenate([params["b_f"], params["b_b"], params["b_lin"]], axis=1)],
        axis=0)                                           # (E + 1, 9H)
    whh = jnp.concatenate([params["whh_f"], params["whh_b"]], axis=1)        # (H, 8H)
    w_head = w_lin[:2 * H]                                                   # (2H, H)
    w_fc_b = jnp.concatenate([params["w_fc"], params["b_fc"]], axis=0)       # (H + 1, O)

    vmem = pl.BlockSpec(memory_space=pltpu.MemorySpace.VMEM)
    # NOTE: for deployed batches > 2, add a batch grid (blocks of >=8 rows) with
    # dimension_semantics=("parallel",) so both v7x TensorCores are used.
    return pl.pallas_call(
        rcnn_kernel,
        out_shape=jax.ShapeDtypeStruct((B, O), jnp.float32),
        in_specs=[vmem] * 5,
        out_specs=vmem,
    )(x_tbe, w_in_b, whh, w_head, w_fc_b)


if __name__ == "__main__":
    B, T = 2, 8
    E, H = Config.embedding_size, Config.hidden_size
    O = 5  # output_size

    key = jax.random.PRNGKey(0)
    keys = jax.random.split(key, 11)
    scale = float(1.0 / (H ** 0.5))

    def u(k, shape):
        return jax.random.uniform(k, shape, jnp.float32, -scale, scale)

    params = dict(
        # (in, out)-layout weights; biases stored as (1, out) and include b_ih + b_hh
        wih_f=u(keys[0], (E, 4 * H)), whh_f=u(keys[1], (H, 4 * H)), b_f=u(keys[2], (1, 4 * H)),
        wih_b=u(keys[3], (E, 4 * H)), whh_b=u(keys[4], (H, 4 * H)), b_b=u(keys[5], (1, 4 * H)),
        w_lin=u(keys[6], (E + 2 * H, H)), b_lin=u(keys[7], (1, H)),
        w_fc=u(keys[8], (H, O)), b_fc=u(keys[9], (1, O)),
    )
    x = jax.random.normal(keys[10], (B, T, E), jnp.float32)

    out = jax.block_until_ready(rcnn_forward(x, params))

    assert out.shape == (B, O)
    assert bool(jnp.all(jnp.isfinite(out)))
    # log-softmax rows must exponentiate to a valid distribution
    assert bool(jnp.allclose(jnp.sum(jnp.exp(out), axis=1), 1.0, atol=1e-4))
    print("KERNEL_OK")
</pallas_src>

<mosaic_0001>
module attributes {stable_mosaic.version = 11 : i64} {
  func.func @rcnn_kernel(%arg0: memref<8x2x32xf32, #tpu.memory_space<vmem>>, %arg1: memref<33x288xf32, #tpu.memory_space<vmem>>, %arg2: memref<32x256xf32, #tpu.memory_space<vmem>>, %arg3: memref<64x32xf32, #tpu.memory_space<vmem>>, %arg4: memref<33x5xf32, #tpu.memory_space<vmem>>, %arg5: memref<2x5xf32, #tpu.memory_space<vmem>>) attributes {dimension_semantics = [], scalar_prefetch = 0 : i64, scratch_operands = 0 : i64, tpu.core_type = #tpu.core_type<tc>} {
    %c0 = arith.constant 0 : index
    %c0_0 = arith.constant 0 : index
    %0 = vector.load %arg1[%c0, %c0_0] : memref<33x288xf32, #tpu.memory_space<vmem>>, vector<32x288xf32>
    %c32 = arith.constant 32 : index
    %c0_1 = arith.constant 0 : index
    %1 = vector.load %arg1[%c32, %c0_1] : memref<33x288xf32, #tpu.memory_space<vmem>>, vector<1x288xf32>
    %c0_2 = arith.constant 0 : index
    %c0_3 = arith.constant 0 : index
    %2 = vector.load %arg2[%c0_2, %c0_3] : memref<32x256xf32, #tpu.memory_space<vmem>>, vector<32x128xf32>
    %c0_4 = arith.constant 0 : index
    %c128 = arith.constant 128 : index
    %3 = vector.load %arg2[%c0_4, %c128] : memref<32x256xf32, #tpu.memory_space<vmem>>, vector<32x128xf32>
    %c0_5 = arith.constant 0 : index
    %c0_6 = arith.constant 0 : index
    %4 = vector.load %arg3[%c0_5, %c0_6] : memref<64x32xf32, #tpu.memory_space<vmem>>, vector<32x32xf32>
    %c32_7 = arith.constant 32 : index
    %c0_8 = arith.constant 0 : index
    %5 = vector.load %arg3[%c32_7, %c0_8] : memref<64x32xf32, #tpu.memory_space<vmem>>, vector<32x32xf32>
    %c0_9 = arith.constant 0 : index
    %c0_10 = arith.constant 0 : index
    %6 = vector.load %arg4[%c0_9, %c0_10] : memref<33x5xf32, #tpu.memory_space<vmem>>, vector<32x5xf32>
    %c32_11 = arith.constant 32 : index
    %c0_12 = arith.constant 0 : index
    %7 = vector.load %arg4[%c32_11, %c0_12] : memref<33x5xf32, #tpu.memory_space<vmem>>, vector<1x5xf32>
    %c0_13 = arith.constant 0 : index
    %c0_14 = arith.constant 0 : index
    %c0_15 = arith.constant 0 : index
    %8 = vector.load %arg0[%c0_13, %c0_14, %c0_15] : memref<8x2x32xf32, #tpu.memory_space<vmem>>, vector<8x2x32xf32>
    %9 = vector.shape_cast %8 : vector<8x2x32xf32> to vector<16x32xf32>
    %cst = arith.constant dense<0.000000e+00> : vector<16x288xf32>
    %10 = tpu.matmul %9, %0, %cst {dimension_numbers = #tpu.dot_dimension_numbers<[1], [0], [0], [1], [0, 0, 1, 1], [], []>} : vector<16x32xf32>, vector<32x288xf32>, vector<16x288xf32> -> vector<16x288xf32>
    %11 = vector.broadcast %1 : vector<1x288xf32> to vector<16x288xf32>
    %12 = arith.addf %10, %11 : vector<16x288xf32>
    %cst_16 = arith.constant 0.000000e+00 : f32
    %13 = vector.broadcast %cst_16 : f32 to vector<2x32xf32>
    %14 = vector.extract_strided_slice %12 {offsets = [0, 0], sizes = [2, 128], strides = [1, 1]} : vector<16x288xf32> to vector<2x128xf32>
    %cst_17 = arith.constant dense<0.000000e+00> : vector<2x128xf32>
    %15 = tpu.matmul %13, %2, %cst_17 {dimension_numbers = #tpu.dot_dimension_numbers<[1], [0], [0], [1], [0, 0, 1, 1], [], []>} : vector<2x32xf32>, vector<32x128xf32>, vector<2x128xf32> -> vector<2x128xf32>
    %16 = arith.addf %14, %15 : vector<2x128xf32>
    %17 = vector.extract_strided_slice %12 {offsets = [14, 128], sizes = [2, 128], strides = [1, 1]} : vector<16x288xf32> to vector<2x128xf32>
    %cst_18 = arith.constant dense<0.000000e+00> : vector<2x128xf32>
    %18 = tpu.matmul %13, %3, %cst_18 {dimension_numbers = #tpu.dot_dimension_numbers<[1], [0], [0], [1], [0, 0, 1, 1], [], []>} : vector<2x32xf32>, vector<32x128xf32>, vector<2x128xf32> -> vector<2x128xf32>
    %19 = arith.addf %17, %18 : vector<2x128xf32>
    %20 = arith.negf %16 : vector<2x128xf32>
    %21 = math.exp %20 : vector<2x128xf32>
    %cst_19 = arith.constant 1.000000e+00 : f32
    %22 = vector.broadcast %cst_19 : f32 to vector<2x128xf32>
    %23 = arith.addf %22, %21 : vector<2x128xf32>
    %24 = arith.divf %22, %23 : vector<2x128xf32>
    %25 = vector.extract_strided_slice %24 {offsets = [0, 0], sizes = [2, 32], strides = [1, 1]} : vector<2x128xf32> to vector<2x32xf32>
    %26 = vector.extract_strided_slice %24 {offsets = [0, 32], sizes = [2, 32], strides = [1, 1]} : vector<2x128xf32> to vector<2x32xf32>
    %27 = vector.extract_strided_slice %24 {offsets = [0, 96], sizes = [2, 32], strides = [1, 1]} : vector<2x128xf32> to vector<2x32xf32>
    %28 = vector.extract_strided_slice %16 {offsets = [0, 64], sizes = [2, 32], strides = [1, 1]} : vector<2x128xf32> to vector<2x32xf32>
    %29 = math.tanh %28 : vector<2x32xf32>
    %30 = arith.mulf %26, %13 : vector<2x32xf32>
    %31 = arith.mulf %25, %29 : vector<2x32xf32>
    %32 = arith.addf %30, %31 : vector<2x32xf32>
    %33 = math.tanh %32 : vector<2x32xf32>
    %34 = arith.mulf %27, %33 : vector<2x32xf32>
    %35 = arith.negf %19 : vector<2x128xf32>
    %36 = math.exp %35 : vector<2x128xf32>
    %cst_20 = arith.constant 1.000000e+00 : f32
    %37 = vector.broadcast %cst_20 : f32 to vector<2x128xf32>
    %38 = arith.addf %37, %36 : vector<2x128xf32>
    %39 = arith.divf %37, %38 : vector<2x128xf32>
    %40 = vector.extract_strided_slice %39 {offsets = [0, 0], sizes = [2, 32], strides = [1, 1]} : vector<2x128xf32> to vector<2x32xf32>
    %41 = vector.extract_strided_slice %39 {offsets = [0, 32], sizes = [2, 32], strides = [1, 1]} : vector<2x128xf32> to vector<2x32xf32>
    %42 = vector.extract_strided_slice %39 {offsets = [0, 96], sizes = [2, 32], strides = [1, 1]} : vector<2x128xf32> to vector<2x32xf32>
    %43 = vector.extract_strided_slice %19 {offsets = [0, 64], sizes = [2, 32], strides = [1, 1]} : vector<2x128xf32> to vector<2x32xf32>
    %44 = math.tanh %43 : vector<2x32xf32>
    %45 = arith.mulf %41, %13 : vector<2x32xf32>
    %46 = arith.mulf %40, %44 : vector<2x32xf32>
    %47 = arith.addf %45, %46 : vector<2x32xf32>
    %48 = math.tanh %47 : vector<2x32xf32>
    %49 = arith.mulf %42, %48 : vector<2x32xf32>
    %50 = vector.extract_strided_slice %12 {offsets = [2, 0], sizes = [2, 128], strides = [1, 1]} : vector<16x288xf32> to vector<2x128xf32>
    %cst_21 = arith.constant dense<0.000000e+00> : vector<2x128xf32>
    %51 = tpu.matmul %34, %2, %cst_21 {dimension_numbers = #tpu.dot_dimension_numbers<[1], [0], [0], [1], [0, 0, 1, 1], [], []>} : vector<2x32xf32>, vector<32x128xf32>, vector<2x128xf32> -> vector<2x128xf32>
    %52 = arith.addf %50, %51 : vector<2x128xf32>
    %53 = vector.extract_strided_slice %12 {offsets = [12, 128], sizes = [2, 128], strides = [1, 1]} : vector<16x288xf32> to vector<2x128xf32>
    %cst_22 = arith.constant dense<0.000000e+00> : vector<2x128xf32>
    %54 = tpu.matmul %49, %3, %cst_22 {dimension_numbers = #tpu.dot_dimension_numbers<[1], [0], [0], [1], [0, 0, 1, 1], [], []>} : vector<2x32xf32>, vector<32x128xf32>, vector<2x128xf32> -> vector<2x128xf32>
    %55 = arith.addf %53, %54 : vector<2x128xf32>
    %56 = arith.negf %52 : vector<2x128xf32>
    %57 = math.exp %56 : vector<2x128xf32>
    %cst_23 = arith.constant 1.000000e+00 : f32
    %58 = vector.broadcast %cst_23 : f32 to vector<2x128xf32>
    %59 = arith.addf %58, %57 : vector<2x128xf32>
    %60 = arith.divf %58, %59 : vector<2x128xf32>
    %61 = vector.extract_strided_slice %60 {offsets = [0, 0], sizes = [2, 32], strides = [1, 1]} : vector<2x128xf32> to vector<2x32xf32>
    %62 = vector.extract_strided_slice %60 {offsets = [0, 32], sizes = [2, 32], strides = [1, 1]} : vector<2x128xf32> to vector<2x32xf32>
    %63 = vector.extract_strided_slice %60 {offsets = [0, 96], sizes = [2, 32], strides = [1, 1]} : vector<2x128xf32> to vector<2x32xf32>
    %64 = vector.extract_strided_slice %52 {offsets = [0, 64], sizes = [2, 32], strides = [1, 1]} : vector<2x128xf32> to vector<2x32xf32>
    %65 = math.tanh %64 : vector<2x32xf32>
    %66 = arith.mulf %62, %32 : vector<2x32xf32>
    %67 = arith.mulf %61, %65 : vector<2x32xf32>
    %68 = arith.addf %66, %67 : vector<2x32xf32>
    %69 = math.tanh %68 : vector<2x32xf32>
    %70 = arith.mulf %63, %69 : vector<2x32xf32>
    %71 = arith.negf %55 : vector<2x128xf32>
    %72 = math.exp %71 : vector<2x128xf32>
    %cst_24 = arith.constant 1.000000e+00 : f32
    %73 = vector.broadcast %cst_24 : f32 to vector<2x128xf32>
    %74 = arith.addf %73, %72 : vector<2x128xf32>
    %75 = arith.divf %73, %74 : vector<2x128xf32>
    %76 = vector.extract_strided_slice %75 {offsets = [0, 0], sizes = [2, 32], strides = [1, 1]} : vector<2x128xf32> to vector<2x32xf32>
    %77 = vector.extract_strided_slice %75 {offsets = [0, 32], sizes = [2, 32], strides = [1, 1]} : vector<2x128xf32> to vector<2x32xf32>
    %78 = vector.extract_strided_slice %75 {offsets = [0, 96], sizes = [2, 32], strides = [1, 1]} : vector<2x128xf32> to vector<2x32xf32>
    %79 = vector.extract_strided_slice %55 {offsets = [0, 64], sizes = [2, 32], strides = [1, 1]} : vector<2x128xf32> to vector<2x32xf32>
    %80 = math.tanh %79 : vector<2x32xf32>
    %81 = arith.mulf %77, %47 : vector<2x32xf32>
    %82 = arith.mulf %76, %80 : vector<2x32xf32>
    %83 = arith.addf %81, %82 : vector<2x32xf32>
    %84 = math.tanh %83 : vector<2x32xf32>
    %85 = arith.mulf %78, %84 : vector<2x32xf32>
    %86 = vector.extract_strided_slice %12 {offsets = [4, 0], sizes = [2, 128], strides = [1, 1]} : vector<16x288xf32> to vector<2x128xf32>
    %cst_25 = arith.constant dense<0.000000e+00> : vector<2x128xf32>
    %87 = tpu.matmul %70, %2, %cst_25 {dimension_numbers = #tpu.dot_dimension_numbers<[1], [0], [0], [1], [0, 0, 1, 1], [], []>} : vector<2x32xf32>, vector<32x128xf32>, vector<2x128xf32> -> vector<2x128xf32>
    %88 = arith.addf %86, %87 : vector<2x128xf32>
    %89 = vector.extract_strided_slice %12 {offsets = [10, 128], sizes = [2, 128], strides = [1, 1]} : vector<16x288xf32> to vector<2x128xf32>
    %cst_26 = arith.constant dense<0.000000e+00> : vector<2x128xf32>
    %90 = tpu.matmul %85, %3, %cst_26 {dimension_numbers = #tpu.dot_dimension_numbers<[1], [0], [0], [1], [0, 0, 1, 1], [], []>} : vector<2x32xf32>, vector<32x128xf32>, vector<2x128xf32> -> vector<2x128xf32>
    %91 = arith.addf %89, %90 : vector<2x128xf32>
    %92 = arith.negf %88 : vector<2x128xf32>
    %93 = math.exp %92 : vector<2x128xf32>
    %cst_27 = arith.constant 1.000000e+00 : f32
    %94 = vector.broadcast %cst_27 : f32 to vector<2x128xf32>
    %95 = arith.addf %94, %93 : vector<2x128xf32>
    %96 = arith.divf %94, %95 : vector<2x128xf32>
    %97 = vector.extract_strided_slice %96 {offsets = [0, 0], sizes = [2, 32], strides = [1, 1]} : vector<2x128xf32> to vector<2x32xf32>
    %98 = vector.extract_strided_slice %96 {offsets = [0, 32], sizes = [2, 32], strides = [1, 1]} : vector<2x128xf32> to vector<2x32xf32>
    %99 = vector.extract_strided_slice %96 {offsets = [0, 96], sizes = [2, 32], strides = [1, 1]} : vector<2x128xf32> to vector<2x32xf32>
    %100 = vector.extract_strided_slice %88 {offsets = [0, 64], sizes = [2, 32], strides = [1, 1]} : vector<2x128xf32> to vector<2x32xf32>
    %101 = math.tanh %100 : vector<2x32xf32>
    %102 = arith.mulf %98, %68 : vector<2x32xf32>
    %103 = arith.mulf %97, %101 : vector<2x32xf32>
    %104 = arith.addf %102, %103 : vector<2x32xf32>
    %105 = math.tanh %104 : vector<2x32xf32>
    %106 = arith.mulf %99, %105 : vector<2x32xf32>
    %107 = arith.negf %91 : vector<2x128xf32>
    %108 = math.exp %107 : vector<2x128xf32>
    %cst_28 = arith.constant 1.000000e+00 : f32
    %109 = vector.broadcast %cst_28 : f32 to vector<2x128xf32>
    %110 = arith.addf %109, %108 : vector<2x128xf32>
    %111 = arith.divf %109, %110 : vector<2x128xf32>
    %112 = vector.extract_strided_slice %111 {offsets = [0, 0], sizes = [2, 32], strides = [1, 1]} : vector<2x128xf32> to vector<2x32xf32>
    %113 = vector.extract_strided_slice %111 {offsets = [0, 32], sizes = [2, 32], strides = [1, 1]} : vector<2x128xf32> to vector<2x32xf32>
    %114 = vector.extract_strided_slice %111 {offsets = [0, 96], sizes = [2, 32], strides = [1, 1]} : vector<2x128xf32> to vector<2x32xf32>
    %115 = vector.extract_strided_slice %91 {offsets = [0, 64], sizes = [2, 32], strides = [1, 1]} : vector<2x128xf32> to vector<2x32xf32>
    %116 = math.tanh %115 : vector<2x32xf32>
    %117 = arith.mulf %113, %83 : vector<2x32xf32>
    %118 = arith.mulf %112, %116 : vector<2x32xf32>
    %119 = arith.addf %117, %118 : vector<2x32xf32>
    %120 = math.tanh %119 : vector<2x32xf32>
    %121 = arith.mulf %114, %120 : vector<2x32xf32>
    %122 = vector.extract_strided_slice %12 {offsets = [6, 0], sizes = [2, 128], strides = [1, 1]} : vector<16x288xf32> to vector<2x128xf32>
    %cst_29 = arith.constant dense<0.000000e+00> : vector<2x128xf32>
    %123 = tpu.matmul %106, %2, %cst_29 {dimension_numbers = #tpu.dot_dimension_numbers<[1], [0], [0], [1], [0, 0, 1, 1], [], []>} : vector<2x32xf32>, vector<32x128xf32>, vector<2x128xf32> -> vector<2x128xf32>
    %124 = arith.addf %122, %123 : vector<2x128xf32>
    %125 = vector.extract_strided_slice %12 {offsets = [8, 128], sizes = [2, 128], strides = [1, 1]} : vector<16x288xf32> to vector<2x128xf32>
    %cst_30 = arith.constant dense<0.000000e+00> : vector<2x128xf32>
    %126 = tpu.matmul %121, %3, %cst_30 {dimension_numbers = #tpu.dot_dimension_numbers<[1], [0], [0], [1], [0, 0, 1, 1], [], []>} : vector<2x32xf32>, vector<32x128xf32>, vector<2x128xf32> -> vector<2x128xf32>
    %127 = arith.addf %125, %126 : vector<2x128xf32>
    %128 = arith.negf %124 : vector<2x128xf32>
    %129 = math.exp %128 : vector<2x128xf32>
    %cst_31 = arith.constant 1.000000e+00 : f32
    %130 = vector.broadcast %cst_31 : f32 to vector<2x128xf32>
    %131 = arith.addf %130, %129 : vector<2x128xf32>
    %132 = arith.divf %130, %131 : vector<2x128xf32>
    %133 = vector.extract_strided_slice %132 {offsets = [0, 0], sizes = [2, 32], strides = [1, 1]} : vector<2x128xf32> to vector<2x32xf32>
    %134 = vector.extract_strided_slice %132 {offsets = [0, 32], sizes = [2, 32], strides = [1, 1]} : vector<2x128xf32> to vector<2x32xf32>
    %135 = vector.extract_strided_slice %132 {offsets = [0, 96], sizes = [2, 32], strides = [1, 1]} : vector<2x128xf32> to vector<2x32xf32>
    %136 = vector.extract_strided_slice %124 {offsets = [0, 64], sizes = [2, 32], strides = [1, 1]} : vector<2x128xf32> to vector<2x32xf32>
    %137 = math.tanh %136 : vector<2x32xf32>
    %138 = arith.mulf %134, %104 : vector<2x32xf32>
    %139 = arith.mulf %133, %137 : vector<2x32xf32>
    %140 = arith.addf %138, %139 : vector<2x32xf32>
    %141 = math.tanh %140 : vector<2x32xf32>
    %142 = arith.mulf %135, %141 : vector<2x32xf32>
    %143 = arith.negf %127 : vector<2x128xf32>
    %144 = math.exp %143 : vector<2x128xf32>
    %cst_32 = arith.constant 1.000000e+00 : f32
    %145 = vector.broadcast %cst_32 : f32 to vector<2x128xf32>
    %146 = arith.addf %145, %144 : vector<2x128xf32>
    %147 = arith.divf %145, %146 : vector<2x128xf32>
    %148 = vector.extract_strided_slice %147 {offsets = [0, 0], sizes = [2, 32], strides = [1, 1]} : vector<2x128xf32> to vector<2x32xf32>
    %149 = vector.extract_strided_slice %147 {offsets = [0, 32], sizes = [2, 32], strides = [1, 1]} : vector<2x128xf32> to vector<2x32xf32>
    %150 = vector.extract_strided_slice %147 {offsets = [0, 96], sizes = [2, 32], strides = [1, 1]} : vector<2x128xf32> to vector<2x32xf32>
    %151 = vector.extract_strided_slice %127 {offsets = [0, 64], sizes = [2, 32], strides = [1, 1]} : vector<2x128xf32> to vector<2x32xf32>
    %152 = math.tanh %151 : vector<2x32xf32>
    %153 = arith.mulf %149, %119 : vector<2x32xf32>
    %154 = arith.mulf %148, %152 : vector<2x32xf32>
    %155 = arith.addf %153, %154 : vector<2x32xf32>
    %156 = math.tanh %155 : vector<2x32xf32>
    %157 = arith.mulf %150, %156 : vector<2x32xf32>
    %158 = vector.extract_strided_slice %12 {offsets = [8, 0], sizes = [2, 128], strides = [1, 1]} : vector<16x288xf32> to vector<2x128xf32>
    %cst_33 = arith.constant dense<0.000000e+00> : vector<2x128xf32>
    %159 = tpu.matmul %142, %2, %cst_33 {dimension_numbers = #tpu.dot_dimension_numbers<[1], [0], [0], [1], [0, 0, 1, 1], [], []>} : vector<2x32xf32>, vector<32x128xf32>, vector<2x128xf32> -> vector<2x128xf32>
    %160 = arith.addf %158, %159 : vector<2x128xf32>
    %161 = vector.extract_strided_slice %12 {offsets = [6, 128], sizes = [2, 128], strides = [1, 1]} : vector<16x288xf32> to vector<2x128xf32>
    %cst_34 = arith.constant dense<0.000000e+00> : vector<2x128xf32>
    %162 = tpu.matmul %157, %3, %cst_34 {dimension_numbers = #tpu.dot_dimension_numbers<[1], [0], [0], [1], [0, 0, 1, 1], [], []>} : vector<2x32xf32>, vector<32x128xf32>, vector<2x128xf32> -> vector<2x128xf32>
    %163 = arith.addf %161, %162 : vector<2x128xf32>
    %164 = arith.negf %160 : vector<2x128xf32>
    %165 = math.exp %164 : vector<2x128xf32>
    %cst_35 = arith.constant 1.000000e+00 : f32
    %166 = vector.broadcast %cst_35 : f32 to vector<2x128xf32>
    %167 = arith.addf %166, %165 : vector<2x128xf32>
    %168 = arith.divf %166, %167 : vector<2x128xf32>
    %169 = vector.extract_strided_slice %168 {offsets = [0, 0], sizes = [2, 32], strides = [1, 1]} : vector<2x128xf32> to vector<2x32xf32>
    %170 = vector.extract_strided_slice %168 {offsets = [0, 32], sizes = [2, 32], strides = [1, 1]} : vector<2x128xf32> to vector<2x32xf32>
    %171 = vector.extract_strided_slice %168 {offsets = [0, 96], sizes = [2, 32], strides = [1, 1]} : vector<2x128xf32> to vector<2x32xf32>
    %172 = vector.extract_strided_slice %160 {offsets = [0, 64], sizes = [2, 32], strides = [1, 1]} : vector<2x128xf32> to vector<2x32xf32>
    %173 = math.tanh %172 : vector<2x32xf32>
    %174 = arith.mulf %170, %140 : vector<2x32xf32>
    %175 = arith.mulf %169, %173 : vector<2x32xf32>
    %176 = arith.addf %174, %175 : vector<2x32xf32>
    %177 = math.tanh %176 : vector<2x32xf32>
    %178 = arith.mulf %171, %177 : vector<2x32xf32>
    %179 = arith.negf %163 : vector<2x128xf32>
    %180 = math.exp %179 : vector<2x128xf32>
    %cst_36 = arith.constant 1.000000e+00 : f32
    %181 = vector.broadcast %cst_36 : f32 to vector<2x128xf32>
    %182 = arith.addf %181, %180 : vector<2x128xf32>
    %183 = arith.divf %181, %182 : vector<2x128xf32>
    %184 = vector.extract_strided_slice %183 {offsets = [0, 0], sizes = [2, 32], strides = [1, 1]} : vector<2x128xf32> to vector<2x32xf32>
    %185 = vector.extract_strided_slice %183 {offsets = [0, 32], sizes = [2, 32], strides = [1, 1]} : vector<2x128xf32> to vector<2x32xf32>
    %186 = vector.extract_strided_slice %183 {offsets = [0, 96], sizes = [2, 32], strides = [1, 1]} : vector<2x128xf32> to vector<2x32xf32>
    %187 = vector.extract_strided_slice %163 {offsets = [0, 64], sizes = [2, 32], strides = [1, 1]} : vector<2x128xf32> to vector<2x32xf32>
    %188 = math.tanh %187 : vector<2x32xf32>
    %189 = arith.mulf %185, %155 : vector<2x32xf32>
    %190 = arith.mulf %184, %188 : vector<2x32xf32>
    %191 = arith.addf %189, %190 : vector<2x32xf32>
    %192 = math.tanh %191 : vector<2x32xf32>
    %193 = arith.mulf %186, %192 : vector<2x32xf32>
    %194 = vector.extract_strided_slice %12 {offsets = [10, 0], sizes = [2, 128], strides = [1, 1]} : vector<16x288xf32> to vector<2x128xf32>
    %cst_37 = arith.constant dense<0.000000e+00> : vector<2x128xf32>
    %195 = tpu.matmul %178, %2, %cst_37 {dimension_numbers = #tpu.dot_dimension_numbers<[1], [0], [0], [1], [0, 0, 1, 1], [], []>} : vector<2x32xf32>, vector<32x128xf32>, vector<2x128xf32> -> vector<2x128xf32>
    %196 = arith.addf %194, %195 : vector<2x128xf32>
    %197 = vector.extract_strided_slice %12 {offsets = [4, 128], sizes = [2, 128], strides = [1, 1]} : vector<16x288xf32> to vector<2x128xf32>
    %cst_38 = arith.constant dense<0.000000e+00> : vector<2x128xf32>
    %198 = tpu.matmul %193, %3, %cst_38 {dimension_numbers = #tpu.dot_dimension_numbers<[1], [0], [0], [1], [0, 0, 1, 1], [], []>} : vector<2x32xf32>, vector<32x128xf32>, vector<2x128xf32> -> vector<2x128xf32>
    %199 = arith.addf %197, %198 : vector<2x128xf32>
    %200 = arith.negf %196 : vector<2x128xf32>
    %201 = math.exp %200 : vector<2x128xf32>
    %cst_39 = arith.constant 1.000000e+00 : f32
    %202 = vector.broadcast %cst_39 : f32 to vector<2x128xf32>
    %203 = arith.addf %202, %201 : vector<2x128xf32>
    %204 = arith.divf %202, %203 : vector<2x128xf32>
    %205 = vector.extract_strided_slice %204 {offsets = [0, 0], sizes = [2, 32], strides = [1, 1]} : vector<2x128xf32> to vector<2x32xf32>
    %206 = vector.extract_strided_slice %204 {offsets = [0, 32], sizes = [2, 32], strides = [1, 1]} : vector<2x128xf32> to vector<2x32xf32>
    %207 = vector.extract_strided_slice %204 {offsets = [0, 96], sizes = [2, 32], strides = [1, 1]} : vector<2x128xf32> to vector<2x32xf32>
    %208 = vector.extract_strided_slice %196 {offsets = [0, 64], sizes = [2, 32], strides = [1, 1]} : vector<2x128xf32> to vector<2x32xf32>
    %209 = math.tanh %208 : vector<2x32xf32>
    %210 = arith.mulf %206, %176 : vector<2x32xf32>
    %211 = arith.mulf %205, %209 : vector<2x32xf32>
    %212 = arith.addf %210, %211 : vector<2x32xf32>
    %213 = math.tanh %212 : vector<2x32xf32>
    %214 = arith.mulf %207, %213 : vector<2x32xf32>
    %215 = arith.negf %199 : vector<2x128xf32>
    %216 = math.exp %215 : vector<2x128xf32>
    %cst_40 = arith.constant 1.000000e+00 : f32
    %217 = vector.broadcast %cst_40 : f32 to vector<2x128xf32>
    %218 = arith.addf %217, %216 : vector<2x128xf32>
    %219 = arith.divf %217, %218 : vector<2x128xf32>
    %220 = vector.extract_strided_slice %219 {offsets = [0, 0], sizes = [2, 32], strides = [1, 1]} : vector<2x128xf32> to vector<2x32xf32>
    %221 = vector.extract_strided_slice %219 {offsets = [0, 32], sizes = [2, 32], strides = [1, 1]} : vector<2x128xf32> to vector<2x32xf32>
    %222 = vector.extract_strided_slice %219 {offsets = [0, 96], sizes = [2, 32], strides = [1, 1]} : vector<2x128xf32> to vector<2x32xf32>
    %223 = vector.extract_strided_slice %199 {offsets = [0, 64], sizes = [2, 32], strides = [1, 1]} : vector<2x128xf32> to vector<2x32xf32>
    %224 = math.tanh %223 : vector<2x32xf32>
    %225 = arith.mulf %221, %191 : vector<2x32xf32>
    %226 = arith.mulf %220, %224 : vector<2x32xf32>
    %227 = arith.addf %225, %226 : vector<2x32xf32>
    %228 = math.tanh %227 : vector<2x32xf32>
    %229 = arith.mulf %222, %228 : vector<2x32xf32>
    %230 = vector.extract_strided_slice %12 {offsets = [12, 0], sizes = [2, 128], strides = [1, 1]} : vector<16x288xf32> to vector<2x128xf32>
    %cst_41 = arith.constant dense<0.000000e+00> : vector<2x128xf32>
    %231 = tpu.matmul %214, %2, %cst_41 {dimension_numbers = #tpu.dot_dimension_numbers<[1], [0], [0], [1], [0, 0, 1, 1], [], []>} : vector<2x32xf32>, vector<32x128xf32>, vector<2x128xf32> -> vector<2x128xf32>
    %232 = arith.addf %230, %231 : vector<2x128xf32>
    %233 = vector.extract_strided_slice %12 {offsets = [2, 128], sizes = [2, 128], strides = [1, 1]} : vector<16x288xf32> to vector<2x128xf32>
    %cst_42 = arith.constant dense<0.000000e+00> : vector<2x128xf32>
    %234 = tpu.matmul %229, %3, %cst_42 {dimension_numbers = #tpu.dot_dimension_numbers<[1], [0], [0], [1], [0, 0, 1, 1], [], []>} : vector<2x32xf32>, vector<32x128xf32>, vector<2x128xf32> -> vector<2x128xf32>
    %235 = arith.addf %233, %234 : vector<2x128xf32>
    %236 = arith.negf %232 : vector<2x128xf32>
    %237 = math.exp %236 : vector<2x128xf32>
    %cst_43 = arith.constant 1.000000e+00 : f32
    %238 = vector.broadcast %cst_43 : f32 to vector<2x128xf32>
    %239 = arith.addf %238, %237 : vector<2x128xf32>
    %240 = arith.divf %238, %239 : vector<2x128xf32>
    %241 = vector.extract_strided_slice %240 {offsets = [0, 0], sizes = [2, 32], strides = [1, 1]} : vector<2x128xf32> to vector<2x32xf32>
    %242 = vector.extract_strided_slice %240 {offsets = [0, 32], sizes = [2, 32], strides = [1, 1]} : vector<2x128xf32> to vector<2x32xf32>
    %243 = vector.extract_strided_slice %240 {offsets = [0, 96], sizes = [2, 32], strides = [1, 1]} : vector<2x128xf32> to vector<2x32xf32>
    %244 = vector.extract_strided_slice %232 {offsets = [0, 64], sizes = [2, 32], strides = [1, 1]} : vector<2x128xf32> to vector<2x32xf32>
    %245 = math.tanh %244 : vector<2x32xf32>
    %246 = arith.mulf %242, %212 : vector<2x32xf32>
    %247 = arith.mulf %241, %245 : vector<2x32xf32>
    %248 = arith.addf %246, %247 : vector<2x32xf32>
    %249 = math.tanh %248 : vector<2x32xf32>
    %250 = arith.mulf %243, %249 : vector<2x32xf32>
    %251 = arith.negf %235 : vector<2x128xf32>
    %252 = math.exp %251 : vector<2x128xf32>
    %cst_44 = arith.constant 1.000000e+00 : f32
    %253 = vector.broadcast %cst_44 : f32 to vector<2x128xf32>
    %254 = arith.addf %253, %252 : vector<2x128xf32>
    %255 = arith.divf %253, %254 : vector<2x128xf32>
    %256 = vector.extract_strided_slice %255 {offsets = [0, 0], sizes = [2, 32], strides = [1, 1]} : vector<2x128xf32> to vector<2x32xf32>
    %257 = vector.extract_strided_slice %255 {offsets = [0, 32], sizes = [2, 32], strides = [1, 1]} : vector<2x128xf32> to vector<2x32xf32>
    %258 = vector.extract_strided_slice %255 {offsets = [0, 96], sizes = [2, 32], strides = [1, 1]} : vector<2x128xf32> to vector<2x32xf32>
    %259 = vector.extract_strided_slice %235 {offsets = [0, 64], sizes = [2, 32], strides = [1, 1]} : vector<2x128xf32> to vector<2x32xf32>
    %260 = math.tanh %259 : vector<2x32xf32>
    %261 = arith.mulf %257, %227 : vector<2x32xf32>
    %262 = arith.mulf %256, %260 : vector<2x32xf32>
    %263 = arith.addf %261, %262 : vector<2x32xf32>
    %264 = math.tanh %263 : vector<2x32xf32>
    %265 = arith.mulf %258, %264 : vector<2x32xf32>
    %266 = vector.extract_strided_slice %12 {offsets = [14, 0], sizes = [2, 128], strides = [1, 1]} : vector<16x288xf32> to vector<2x128xf32>
    %cst_45 = arith.constant dense<0.000000e+00> : vector<2x128xf32>
    %267 = tpu.matmul %250, %2, %cst_45 {dimension_numbers = #tpu.dot_dimension_numbers<[1], [0], [0], [1], [0, 0, 1, 1], [], []>} : vector<2x32xf32>, vector<32x128xf32>, vector<2x128xf32> -> vector<2x128xf32>
    %268 = arith.addf %266, %267 : vector<2x128xf32>
    %269 = vector.extract_strided_slice %12 {offsets = [0, 128], sizes = [2, 128], strides = [1, 1]} : vector<16x288xf32> to vector<2x128xf32>
    %cst_46 = arith.constant dense<0.000000e+00> : vector<2x128xf32>
    %270 = tpu.matmul %265, %3, %cst_46 {dimension_numbers = #tpu.dot_dimension_numbers<[1], [0], [0], [1], [0, 0, 1, 1], [], []>} : vector<2x32xf32>, vector<32x128xf32>, vector<2x128xf32> -> vector<2x128xf32>
    %271 = arith.addf %269, %270 : vector<2x128xf32>
    %272 = arith.negf %268 : vector<2x128xf32>
    %273 = math.exp %272 : vector<2x128xf32>
    %cst_47 = arith.constant 1.000000e+00 : f32
    %274 = vector.broadcast %cst_47 : f32 to vector<2x128xf32>
    %275 = arith.addf %274, %273 : vector<2x128xf32>
    %276 = arith.divf %274, %275 : vector<2x128xf32>
    %277 = vector.extract_strided_slice %276 {offsets = [0, 0], sizes = [2, 32], strides = [1, 1]} : vector<2x128xf32> to vector<2x32xf32>
    %278 = vector.extract_strided_slice %276 {offsets = [0, 32], sizes = [2, 32], strides = [1, 1]} : vector<2x128xf32> to vector<2x32xf32>
    %279 = vector.extract_strided_slice %276 {offsets = [0, 96], sizes = [2, 32], strides = [1, 1]} : vector<2x128xf32> to vector<2x32xf32>
    %280 = vector.extract_strided_slice %268 {offsets = [0, 64], sizes = [2, 32], strides = [1, 1]} : vector<2x128xf32> to vector<2x32xf32>
    %281 = math.tanh %280 : vector<2x32xf32>
    %282 = arith.mulf %278, %248 : vector<2x32xf32>
    %283 = arith.mulf %277, %281 : vector<2x32xf32>
    %284 = arith.addf %282, %283 : vector<2x32xf32>
    %285 = math.tanh %284 : vector<2x32xf32>
    %286 = arith.mulf %279, %285 : vector<2x32xf32>
    %287 = arith.negf %271 : vector<2x128xf32>
    %288 = math.exp %287 : vector<2x128xf32>
    %cst_48 = arith.constant 1.000000e+00 : f32
    %289 = vector.broadcast %cst_48 : f32 to vector<2x128xf32>
    %290 = arith.addf %289, %288 : vector<2x128xf32>
    %291 = arith.divf %289, %290 : vector<2x128xf32>
    %292 = vector.extract_strided_slice %291 {offsets = [0, 0], sizes = [2, 32], strides = [1, 1]} : vector<2x128xf32> to vector<2x32xf32>
    %293 = vector.extract_strided_slice %291 {offsets = [0, 32], sizes = [2, 32], strides = [1, 1]} : vector<2x128xf32> to vector<2x32xf32>
    %294 = vector.extract_strided_slice %291 {offsets = [0, 96], sizes = [2, 32], strides = [1, 1]} : vector<2x128xf32> to vector<2x32xf32>
    %295 = vector.extract_strided_slice %271 {offsets = [0, 64], sizes = [2, 32], strides = [1, 1]} : vector<2x128xf32> to vector<2x32xf32>
    %296 = math.tanh %295 : vector<2x32xf32>
    %297 = arith.mulf %293, %263 : vector<2x32xf32>
    %298 = arith.mulf %292, %296 : vector<2x32xf32>
    %299 = arith.addf %297, %298 : vector<2x32xf32>
    %300 = math.tanh %299 : vector<2x32xf32>
    %301 = arith.mulf %294, %300 : vector<2x32xf32>
    %302 = tpu.concatenate %34, %70, %106, %142, %178, %214, %250, %286 in 0 : vector<2x32xf32>, vector<2x32xf32>, vector<2x32xf32>, vector<2x32xf32>, vector<2x32xf32>, vector<2x32xf32>, vector<2x32xf32>, vector<2x32xf32> -> vector<16x32xf32>
    %303 = tpu.concatenate %301, %265, %229, %193, %157, %121, %85, %49 in 0 : vector<2x32xf32>, vector<2x32xf32>, vector<2x32xf32>, vector<2x32xf32>, vector<2x32xf32>, vector<2x32xf32>, vector<2x32xf32>, vector<2x32xf32> -> vector<16x32xf32>
    %cst_49 = arith.constant dense<0.000000e+00> : vector<16x32xf32>
    %304 = tpu.matmul %302, %4, %cst_49 {dimension_numbers = #tpu.dot_dimension_numbers<[1], [0], [0], [1], [0, 0, 1, 1], [], []>} : vector<16x32xf32>, vector<32x32xf32>, vector<16x32xf32> -> vector<16x32xf32>
    %cst_50 = arith.constant dense<0.000000e+00> : vector<16x32xf32>
    %305 = tpu.matmul %303, %5, %cst_50 {dimension_numbers = #tpu.dot_dimension_numbers<[1], [0], [0], [1], [0, 0, 1, 1], [], []>} : vector<16x32xf32>, vector<32x32xf32>, vector<16x32xf32> -> vector<16x32xf32>
    %306 = arith.addf %304, %305 : vector<16x32xf32>
    %307 = vector.extract_strided_slice %12 {offsets = [0, 256], sizes = [16, 32], strides = [1, 1]} : vector<16x288xf32> to vector<16x32xf32>
    %308 = arith.addf %306, %307 : vector<16x32xf32>
    %309 = math.tanh %308 : vector<16x32xf32>
    %310 = vector.shape_cast %309 : vector<16x32xf32> to vector<8x2x32xf32>
    %cst_51 = arith.constant dense<0xFF800000> : vector<2x32xf32>
    %311 = vector.multi_reduction <maximumf>, %310, %cst_51 [0] : vector<8x2x32xf32> to vector<2x32xf32>
    %cst_52 = arith.constant dense<0.000000e+00> : vector<2x5xf32>
    %312 = tpu.matmul %311, %6, %cst_52 {dimension_numbers = #tpu.dot_dimension_numbers<[1], [0], [0], [1], [0, 0, 1, 1], [], []>} : vector<2x32xf32>, vector<32x5xf32>, vector<2x5xf32> -> vector<2x5xf32>
    %313 = vector.broadcast %7 : vector<1x5xf32> to vector<2x5xf32>
    %314 = arith.addf %312, %313 : vector<2x5xf32>
    %cst_53 = arith.constant dense<0xFF800000> : vector<2xf32>
    %315 = vector.multi_reduction <maximumf>, %314, %cst_53 [1] : vector<2x5xf32> to vector<2xf32>
    %316 = vector.shape_cast %315 : vector<2xf32> to vector<2x1xf32>
    %317 = vector.broadcast %316 : vector<2x1xf32> to vector<2x5xf32>
    %318 = arith.subf %314, %317 : vector<2x5xf32>
    %319 = math.exp %318 : vector<2x5xf32>
    %cst_54 = arith.constant dense<0.000000e+00> : vector<2xf32>
    %320 = vector.multi_reduction <add>, %319, %cst_54 [1] : vector<2x5xf32> to vector<2xf32>
    %321 = vector.shape_cast %320 : vector<2xf32> to vector<2x1xf32>
    %322 = math.log %321 : vector<2x1xf32>
    %323 = vector.broadcast %322 : vector<2x1xf32> to vector<2x5xf32>
    %324 = arith.subf %318, %323 : vector<2x5xf32>
    %c0_55 = arith.constant 0 : index
    %c0_56 = arith.constant 0 : index
    %325 = vector.load %arg5[%c0_55, %c0_56] : memref<2x5xf32, #tpu.memory_space<vmem>>, vector<2x5xf32>
    tpu.vector_store %arg5[%c0_55, %c0_56], %324 {strides = array<i32>} : memref<2x5xf32, #tpu.memory_space<vmem>>, vector<2x5xf32>,
    return
  }
}

</mosaic_0001>

<llo_original>
// kernel: tpu_custom_call.1
$region0: #{tpu_custom_call.1}
  #allocation0 [shape = 'u32[]', space=smem, size = 0x4, offset = 0x4, fixed_abs, tag = 'smem constant byte address 0x4 - core index']
  #allocation1 [shape = 'u32[144,128]{1,0:T(1,128)}', space=vmem, size = 0x12000, scoped, tag = 'internal scratch']
  %s0 = inlined_call_operand.hbm [shape: f32[8,2,32], index: 0, kind: input, shape index: {}]
  %s1 = inlined_call_operand.vmem [shape: f32[33,288], index: 1, kind: input, shape index: {}]
  %s2 = inlined_call_operand.hbm [shape: f32[32,256], index: 2, kind: input, shape index: {}]
  %s3 = inlined_call_operand.vmem [shape: f32[64,32], index: 3, kind: input, shape index: {}]
  %s4 = inlined_call_operand.vmem [shape: f32[33,5], index: 4, kind: input, shape index: {}]
  %s5 = inlined_call_operand.hbm [shape: f32[2,5], index: 5, kind: output, shape index: {}]
  %s6 = sld [smem:[#allocation0]]
  $region38: #{tpu_custom_call.1} parent=0
    _
  %s8 = ssub.s32 1, %s6
  %s9 = scalar_select 0, %s8, %s6
  $region1: #{tpu_custom_call.1} parent=0
    #allocation2 [shape = 'u8[8192]{0}', space=vmem, size = 0x2000, scoped, tag = 'input window, operand 0, single buffered']
    #allocation3 [shape = 's32[1]{0}', space=sflag, size = 0x4, scoped, tag = 'scoped memory for tpu_custom_call.1']
    #allocation4 [shape = 's32[1]{0}', space=sflag, size = 0x4, scoped, tag = 'scoped memory for tpu_custom_call.1']
    #allocation5 [shape = 'u8[32768]{0}', space=vmem, size = 0x8000, scoped, tag = 'input window, operand 2, single buffered']
    #allocation6 [shape = 's32[1]{0}', space=sflag, size = 0x4, scoped, tag = 'scoped memory for tpu_custom_call.1']
    #allocation7 [shape = 'u8[1024]{0}', space=vmem, size = 0x400, scoped, tag = 'output window, operand 0, single buffered']
    %10 = vsyncpa [#allocation3], 0
    %11 = vsyncpa [#allocation6], 0
    %12 = vsyncpa [#allocation4], 0
    // Predicated region
    $region2: #{tpu_custom_call.1} parent=1 // pred_check
      _
    $region3: #{tpu_custom_call.1} parent=1 // pred_check_branch
      %14 = sbr.rel (0) target = $region5
    $region4: #{tpu_custom_call.1} parent=1 // pred_region
      %s16 = ssub.s32 256, 256
      %17 = vsyncadd [#allocation3], %s16
      %s18 = sshll.u32 [#allocation2], 4
      %s19 = int_to_ptr.vmem [resolvable:$true] %s18
      %24 = dma.hbm_to_vmem [thread:$0]  %s0, 256, %s19, [#allocation3], 32, 32, 2
    $region5: #{tpu_custom_call.1} parent=1 // pred_fallthru
      _
    // Predicated region
    $region6: #{tpu_custom_call.1} parent=1 // pred_check
      _
    $region7: #{tpu_custom_call.1} parent=1 // pred_check_branch
      %26 = sbr.rel (0) target = $region9
    $region8: #{tpu_custom_call.1} parent=1 // pred_region
      _
    $region9: #{tpu_custom_call.1} parent=1 // pred_fallthru
      _
    // Predicated region
    $region10: #{tpu_custom_call.1} parent=1 // pred_check
      _
    $region11: #{tpu_custom_call.1} parent=1 // pred_check_branch
      %28 = sbr.rel (0) target = $region13
    $region12: #{tpu_custom_call.1} parent=1 // pred_region
      %s30 = ssub.s32 1024, 1024
      %31 = vsyncadd [#allocation6], %s30
      %s32 = sshll.u32 [#allocation5], 4
      %s33 = int_to_ptr.vmem [resolvable:$true] %s32
      %38 = dma.hbm_to_vmem [thread:$0]  %s2, 1024, %s33, [#allocation6], 256, 256, 16
    $region13: #{tpu_custom_call.1} parent=1 // pred_fallthru
      _
    // Predicated region
    $region14: #{tpu_custom_call.1} parent=1 // pred_check
      _
    $region15: #{tpu_custom_call.1} parent=1 // pred_check_branch
      %40 = sbr.rel (0) target = $region17
    $region16: #{tpu_custom_call.1} parent=1 // pred_region
      _
    $region17: #{tpu_custom_call.1} parent=1 // pred_fallthru
      _
    // Predicated region
    $region18: #{tpu_custom_call.1} parent=1 // pred_check
      _
    $region19: #{tpu_custom_call.1} parent=1 // pred_check_branch
      %42 = sbr.rel (0) target = $region21
    $region20: #{tpu_custom_call.1} parent=1 // pred_region
      _
    $region21: #{tpu_custom_call.1} parent=1 // pred_fallthru
      _
    // Predicated region
    $region22: #{tpu_custom_call.1} parent=1 // pred_check
      _
    $region23: #{tpu_custom_call.1} parent=1 // pred_check_branch
      %44 = sbr.rel (0) target = $region25
    $region24: #{tpu_custom_call.1} parent=1 // pred_region
      %45 = dma.done [#allocation3], 256
    $region25: #{tpu_custom_call.1} parent=1 // pred_fallthru
      _
    // Predicated region
    $region26: #{tpu_custom_call.1} parent=1 // pred_check
      _
    $region27: #{tpu_custom_call.1} parent=1 // pred_check_branch
      %47 = sbr.rel (0) target = $region29
    $region28: #{tpu_custom_call.1} parent=1 // pred_region
      %48 = dma.done [#allocation6], 1024
    $region29: #{tpu_custom_call.1} parent=1 // pred_fallthru
      _
    %v49 = vld [vmem:[%s1] sm:$0xff]
    %v50 = vld [vmem:[%s1 + $0x8] sm:$0xff]
    %v51 = vld [vmem:[%s1 + $0x10] sm:$0xff]
    %v52 = vld [vmem:[%s1 + $0x18] sm:$0xff]
    %v53 = vld [vmem:[%s1 + $0x20] sm:$0xff]
    %v54 = vld [vmem:[%s1 + $0x28] sm:$0xff]
    %v55 = vld [vmem:[%s1 + $0x30] sm:$0xff]
    %v56 = vld [vmem:[%s1 + $0x38] sm:$0xff]
    %v57 = vld [vmem:[%s1 + $0x40] sm:$0xff]
    %v58 = vld [vmem:[%s1 + $0x48] sm:$0xff]
    %v59 = vld [vmem:[%s1 + $0x50] sm:$0xff]
    %v60 = vld [vmem:[%s1 + $0x58] sm:$0xff]
    %s61 = scalar_lea.vmem %s1, 96
    %v62 = vld [vmem:[%s61] ss:$8 sm:$0x7]
    %v63 = vld [vmem:[#allocation5] sm:$0xff]
    %v64 = vld [vmem:[#allocation5 + $0x10] sm:$0xff]
    %v65 = vld [vmem:[#allocation5 + $0x20] sm:$0xff]
    %v66 = vld [vmem:[#allocation5 + $0x30] sm:$0xff]
    %v67 = vld [vmem:[#allocation5 + $0x8] sm:$0xff]
    %v68 = vld [vmem:[#allocation5 + $0x18] sm:$0xff]
    %v69 = vld [vmem:[#allocation5 + $0x28] sm:$0xff]
    %v70 = vld [vmem:[#allocation5 + $0x38] sm:$0xff]
    %v71 = vld [vmem:[%s3] sm:$0xff]
    %v72 = vld [vmem:[%s3 + $0x8] sm:$0xff]
    %v73 = vld [vmem:[%s3 + $0x10] sm:$0xff]
    %v74 = vld [vmem:[%s3 + $0x18] sm:$0xff]
    %v75 = vld [vmem:[%s3 + $0x20] sm:$0xff]
    %v76 = vld [vmem:[%s3 + $0x28] sm:$0xff]
    %v77 = vld [vmem:[%s3 + $0x30] sm:$0xff]
    %v78 = vld [vmem:[%s3 + $0x38] sm:$0xff]
    %v79 = vld [vmem:[%s4] sm:$0xff]
    %v80 = vld [vmem:[%s4 + $0x8] sm:$0xff]
    %v81 = vld [vmem:[%s4 + $0x10] sm:$0xff]
    %v82 = vld [vmem:[%s4 + $0x18] sm:$0xff]
    %v83 = vld [vmem:[%s4 + $0x20] sm:$0x1]
    %v84 = vld [vmem:[#allocation2] sm:$0x3]
    %v85 = vld [vmem:[#allocation2 + $0x2] sm:$0x3]
    %v86 = vld [vmem:[#allocation2 + $0x4] sm:$0x3]
    %v87 = vld [vmem:[#allocation2 + $0x6] sm:$0x3]
    %v88 = vld [vmem:[#allocation2 + $0x8] sm:$0x3]
    %v89 = vld [vmem:[#allocation2 + $0xa] sm:$0x3]
    %v90 = vld [vmem:[#allocation2 + $0xc] sm:$0x3]
    %v91 = vld [vmem:[#allocation2 + $0xe] sm:$0x3]
    %v93 = vlaneseq
    %v94 = vshrl.u32 %v93, 7
    %v95 = vsub.s32 0, %v94
    %v96 = vrot.slane %v62, %v95
    %v97 = vlaneseq
    %v98 = vshrl.u32 %v97, 7
    %v99 = vsub.s32 1, %v98
    %v100 = vrot.slane %v62, %v99
    %v101 = vlaneseq
    %v102 = vshrl.u32 %v101, 7
    %v103 = vsub.s32 2, %v102
    %v104 = vrot.slane %v62, %v103
    %v116 = vcombine.low %v84, %v85
    %v117 = vcombine.low %v86, %v87
    %v119 = vunpack.c.l.s4 1983009808
    %v120 = vunpack.c.0.s8 %v119
    %v121 = vlaneseq
    %v122 = vshrl.u32 %v121, 7
    %v123 = vsub.s32 %v120, %v122
    %v124 = vrot.slane %v116, %v123
    %v126 = vunpack.c.l.s4 1983009808
    %v127 = vunpack.c.0.s8 %v126
    %v128 = vlaneseq
    %v129 = vshrl.u32 %v128, 7
    %v130 = vsub.s32 %v127, %v129
    %v131 = vrot.slane %v117, %v130
    %v132 = vcombine.low %v124, %v131
    %v133 = vcombine.low %v88, %v89
    %v134 = vcombine.low %v90, %v91
    %v136 = vunpack.c.l.s4 1983009808
    %v137 = vunpack.c.0.s8 %v136
    %v138 = vlaneseq
    %v139 = vshrl.u32 %v138, 7
    %v140 = vsub.s32 %v137, %v139
    %v141 = vrot.slane %v133, %v140
    %v143 = vunpack.c.l.s4 1983009808
    %v144 = vunpack.c.0.s8 %v143
    %v145 = vlaneseq
    %v146 = vshrl.u32 %v145, 7
    %v147 = vsub.s32 %v144, %v146
    %v148 = vrot.slane %v134, %v147
    %v149 = vcombine.low %v141, %v148
    %vm150 = vcmask 261120
    %v151 = vsel %vm150, %v132, 0
    %v153 = vsel %vm150, %v149, 0
    %155 = vmatprep.subr.mxu0 %v50
    %156 = vmatpush1.msra.mxu0 %v49
    %157 = vmatprep.subr.mxu0 %v53
    %158 = vmatpush1.msra.mxu0 %v52
    %159 = vmatprep.subr.mxu0 %v56
    %160 = vmatpush1.msra.mxu0 %v55
    %161 = vmatprep.subr.mxu0 %v59
    %162 = vmatpush1.msra.mxu0 %v58
    %163 = vmatprep.subr.mxu0 0.0
    %164 = vmatpush1.msra.mxu0 0.0
    %165 = vmatprep.subr.mxu0 0.0
    %166 = vmatpush1.msra.mxu0 0.0
    %167 = vmatprep.subr.mxu0 0.0
    %168 = vmatpush1.msra.mxu0 0.0
    %169 = vmatprep.subr.mxu0 0.0
    %170 = vmatpush1.msra.mxu0 0.0
    %171 = vmatprep.subr.mxu0 0.0
    %172 = vmatpush1.msra.mxu0 0.0
    %173 = vmatprep.subr.mxu0 0.0
    %174 = vmatpush1.msra.mxu0 0.0
    %175 = vmatprep.subr.mxu0 0.0
    %176 = vmatpush1.msra.mxu0 0.0
    %177 = vmatprep.subr.mxu0 0.0
    %178 = vmatpush1.msra.mxu0 0.0
    %179 = vmatprep.subr.mxu0 0.0
    %180 = vmatpush1.msra.mxu0 0.0
    %181 = vmatprep.subr.mxu0 0.0
    %182 = vmatpush1.msra.mxu0 0.0
    %183 = vmatprep.subr.mxu0 0.0
    %184 = vmatpush1.msra.mxu0 0.0
    %185 = vmatprep.subr.mxu0 0.0
    %186 = vmatpush1.msra.mxu0 0.0
    %187 = vmatprep.subr.mxu0 0.0
    %188 = vmatpush1.msra.mxu0 0.0
    %189 = vmatprep.subr.mxu0 0.0
    %190 = vmatpush1.msra.mxu0 0.0
    %191 = vmatprep.subr.mxu0 0.0
    %192 = vmatpush1.msra.mxu0 0.0
    %193 = vmatprep.subr.mxu0 0.0
    %194 = vmatpush1.msra.mxu0 0.0
    %195 = vmatprep.subr.mxu0 0.0
    %196 = vmatpush1.msra.mxu0 0.0
    %197 = vmatprep.subr.mxu0 0.0
    %198 = vmatpush1.msra.mxu0 0.0
    %199 = vmatprep.subr.mxu0 0.0
    %200 = vmatpush1.msra.mxu0 0.0
    %201 = vmatprep.subr.mxu0 0.0
    %202 = vmatpush1.msra.mxu0 0.0
    %203 = vmatprep.subr.mxu0 0.0
    %204 = vmatpush1.msra.mxu0 0.0
    %205 = vmatprep.subr.mxu0 0.0
    %206 = vmatpush1.msra.mxu0 0.0
    %207 = vmatprep.subr.mxu0 0.0
    %208 = vmatpush1.msra.mxu0 0.0
    %209 = vmatprep.subr.mxu0 0.0
    %210 = vmatpush1.msra.mxu0 0.0
    %211 = vmatprep.subr.mxu0 0.0
    %212 = vmatpush1.msra.mxu0 0.0
    %213 = vmatprep.subr.mxu0 0.0
    %214 = vmatpush1.msra.mxu0 0.0
    %215 = vmatprep.subr.mxu0 0.0
    %216 = vmatpush1.msra.mxu0 0.0
    %217 = vmatprep.subr.mxu0 0.0
    %218 = vmatpush1.msra.mxu0 0.0
    %219 = vmatprep.mubr.f32.mxu0 0.0
    %220 = vmatmul.mubr.f32.gmra.mrb[0].mxu0 %v151
    %v221 = vpop.f32.mrb[0].mxu0
    %v222 = vadd.f32 %v96, %v221
    %v223 = vpop.f32.mrb[0].mxu0
    %v224 = vadd.f32 %v100, %v223
    %225 = vmatprep.mubr.f32.mxu0 0.0
    %226 = vmatmul.mubr.f32.gmra.mrb[0].mxu0 %v153
    %v227 = vpop.f32.mrb[0].mxu0
    %v228 = vadd.f32 %v96, %v227
    %v229 = vpop.f32.mrb[0].mxu0
    %v230 = vadd.f32 %v100, %v229
    %231 = vdwg.mxu0
    %232 = vmatprep.subr.mxu0 0.0
    %233 = vmatpush1.msra.mxu0 %v51
    %234 = vmatprep.subr.mxu0 0.0
    %235 = vmatpush1.msra.mxu0 %v54
    %236 = vmatprep.subr.mxu0 0.0
    %237 = vmatpush1.msra.mxu0 %v57
    %238 = vmatprep.subr.mxu0 0.0
    %239 = vmatpush1.msra.mxu0 %v60
    %240 = vmatprep.subr.mxu0 0.0
    %241 = vmatpush1.msra.mxu0 0.0
    %242 = vmatprep.subr.mxu0 0.0
    %243 = vmatpush1.msra.mxu0 0.0
    %244 = vmatprep.subr.mxu0 0.0
    %245 = vmatpush1.msra.mxu0 0.0
    %246 = vmatprep.subr.mxu0 0.0
    %247 = vmatpush1.msra.mxu0 0.0
    %248 = vmatprep.subr.mxu0 0.0
    %249 = vmatpush1.msra.mxu0 0.0
    %250 = vmatprep.subr.mxu0 0.0
    %251 = vmatpush1.msra.mxu0 0.0
    %252 = vmatprep.subr.mxu0 0.0
    %253 = vmatpush1.msra.mxu0 0.0
    %254 = vmatprep.subr.mxu0 0.0
    %255 = vmatpush1.msra.mxu0 0.0
    %256 = vmatprep.subr.mxu0 0.0
    %257 = vmatpush1.msra.mxu0 0.0
    %258 = vmatprep.subr.mxu0 0.0
    %259 = vmatpush1.msra.mxu0 0.0
    %260 = vmatprep.subr.mxu0 0.0
    %261 = vmatpush1.msra.mxu0 0.0
    %262 = vmatprep.subr.mxu0 0.0
    %263 = vmatpush1.msra.mxu0 0.0
    %264 = vmatprep.subr.mxu0 0.0
    %265 = vmatpush1.msra.mxu0 0.0
    %266 = vmatprep.subr.mxu0 0.0
    %267 = vmatpush1.msra.mxu0 0.0
    %268 = vmatprep.subr.mxu0 0.0
    %269 = vmatpush1.msra.mxu0 0.0
    %270 = vmatprep.subr.mxu0 0.0
    %271 = vmatpush1.msra.mxu0 0.0
    %272 = vmatprep.subr.mxu0 0.0
    %273 = vmatpush1.msra.mxu0 0.0
    %274 = vmatprep.subr.mxu0 0.0
    %275 = vmatpush1.msra.mxu0 0.0
    %276 = vmatprep.subr.mxu0 0.0
    %277 = vmatpush1.msra.mxu0 0.0
    %278 = vmatprep.subr.mxu0 0.0
    %279 = vmatpush1.msra.mxu0 0.0
    %280 = vmatprep.subr.mxu0 0.0
    %281 = vmatpush1.msra.mxu0 0.0
    %282 = vmatprep.subr.mxu0 0.0
    %283 = vmatpush1.msra.mxu0 0.0
    %284 = vmatprep.subr.mxu0 0.0
    %285 = vmatpush1.msra.mxu0 0.0
    %286 = vmatprep.subr.mxu0 0.0
    %287 = vmatpush1.msra.mxu0 0.0
    %288 = vmatprep.subr.mxu0 0.0
    %289 = vmatpush1.msra.mxu0 0.0
    %290 = vmatprep.subr.mxu0 0.0
    %291 = vmatpush1.msra.mxu0 0.0
    %292 = vmatprep.subr.mxu0 0.0
    %293 = vmatpush1.msra.mxu0 0.0
    %294 = vmatprep.subr.mxu0 0.0
    %295 = vmatpush1.msra.mxu0 0.0
    %296 = vmatprep.mubr.f32.mxu0 0.0
    %297 = vmatmul.mubr.f32.gmra.mrb[0].mxu0 %v151
    %v298 = vpop.f32.mrb[0].mxu0
    %v299 = vadd.f32 %v104, %v298
    %v300 = vpop.f32.mrb[0].mxu0
    %301 = vmatprep.mubr.f32.mxu0 0.0
    %302 = vmatmul.mubr.f32.gmra.mrb[0].mxu0 %v153
    %v303 = vpop.f32.mrb[0].mxu0
    %v304 = vadd.f32 %v104, %v303
    %v305 = vpop.f32.mrb[0].mxu0
    %306 = vdwg.mxu0
    %v308 = vsel %vm150, 0.0, 0
    %310 = vmatprep.subr.mxu0 0.0
    %311 = vmatpush1.msra.mxu0 %v63
    %312 = vmatprep.subr.mxu0 0.0
    %313 = vmatpush1.msra.mxu0 %v64
    %314 = vmatprep.subr.mxu0 0.0
    %315 = vmatpush1.msra.mxu0 %v65
    %316 = vmatprep.subr.mxu0 0.0
    %317 = vmatpush1.msra.mxu0 %v66
    %318 = vmatprep.subr.mxu0 0.0
    %319 = vmatpush1.msra.mxu0 0.0
    %320 = vmatprep.subr.mxu0 0.0
    %321 = vmatpush1.msra.mxu0 0.0
    %322 = vmatprep.subr.mxu0 0.0
    %323 = vmatpush1.msra.mxu0 0.0
    %324 = vmatprep.subr.mxu0 0.0
    %325 = vmatpush1.msra.mxu0 0.0
    %326 = vmatprep.subr.mxu0 0.0
    %327 = vmatpush1.msra.mxu0 0.0
    %328 = vmatprep.subr.mxu0 0.0
    %329 = vmatpush1.msra.mxu0 0.0
    %330 = vmatprep.subr.mxu0 0.0
    %331 = vmatpush1.msra.mxu0 0.0
    %332 = vmatprep.subr.mxu0 0.0
    %333 = vmatpush1.msra.mxu0 0.0
    %334 = vmatprep.subr.mxu0 0.0
    %335 = vmatpush1.msra.mxu0 0.0
    %336 = vmatprep.subr.mxu0 0.0
    %337 = vmatpush1.msra.mxu0 0.0
    %338 = vmatprep.subr.mxu0 0.0
    %339 = vmatpush1.msra.mxu0 0.0
    %340 = vmatprep.subr.mxu0 0.0
    %341 = vmatpush1.msra.mxu0 0.0
    %342 = vmatprep.subr.mxu0 0.0
    %343 = vmatpush1.msra.mxu0 0.0
    %344 = vmatprep.subr.mxu0 0.0
    %345 = vmatpush1.msra.mxu0 0.0
    %346 = vmatprep.subr.mxu0 0.0
    %347 = vmatpush1.msra.mxu0 0.0
    %348 = vmatprep.subr.mxu0 0.0
    %349 = vmatpush1.msra.mxu0 0.0
    %350 = vmatprep.subr.mxu0 0.0
    %351 = vmatpush1.msra.mxu0 0.0
    %352 = vmatprep.subr.mxu0 0.0
    %353 = vmatpush1.msra.mxu0 0.0
    %354 = vmatprep.subr.mxu0 0.0
    %355 = vmatpush1.msra.mxu0 0.0
    %356 = vmatprep.subr.mxu0 0.0
    %357 = vmatpush1.msra.mxu0 0.0
    %358 = vmatprep.subr.mxu0 0.0
    %359 = vmatpush1.msra.mxu0 0.0
    %360 = vmatprep.subr.mxu0 0.0
    %361 = vmatpush1.msra.mxu0 0.0
    %362 = vmatprep.subr.mxu0 0.0
    %363 = vmatpush1.msra.mxu0 0.0
    %364 = vmatprep.subr.mxu0 0.0
    %365 = vmatpush1.msra.mxu0 0.0
    %366 = vmatprep.subr.mxu0 0.0
    %367 = vmatpush1.msra.mxu0 0.0
    %368 = vmatprep.subr.mxu0 0.0
    %369 = vmatpush1.msra.mxu0 0.0
    %370 = vmatprep.subr.mxu0 0.0
    %371 = vmatpush1.msra.mxu0 0.0
    %372 = vmatprep.subr.mxu0 0.0
    %373 = vmatpush1.msra.mxu0 0.0
    %374 = vmatprep.mubr.f32.mxu0 0.0
    %375 = vmatmul.mubr.f32.gmra.mrb[0].mxu0 %v308
    %v376 = vpop.f32.mrb[0].mxu0
    %v377 = vadd.f32 0.0, %v376
    %v378 = vpop.f32.mrb[0].mxu0
    %379 = vdwg.mxu0
    %v380 = vadd.f32 %v222, %v377
    %381 = vmatprep.subr.mxu0 0.0
    %382 = vmatpush1.msra.mxu0 %v67
    %383 = vmatprep.subr.mxu0 0.0
    %384 = vmatpush1.msra.mxu0 %v68
    %385 = vmatprep.subr.mxu0 0.0
    %386 = vmatpush1.msra.mxu0 %v69
    %387 = vmatprep.subr.mxu0 0.0
    %388 = vmatpush1.msra.mxu0 %v70
    %389 = vmatprep.subr.mxu0 0.0
    %390 = vmatpush1.msra.mxu0 0.0
    %391 = vmatprep.subr.mxu0 0.0
    %392 = vmatpush1.msra.mxu0 0.0
    %393 = vmatprep.subr.mxu0 0.0
    %394 = vmatpush1.msra.mxu0 0.0
    %395 = vmatprep.subr.mxu0 0.0
    %396 = vmatpush1.msra.mxu0 0.0
    %397 = vmatprep.subr.mxu0 0.0
    %398 = vmatpush1.msra.mxu0 0.0
    %399 = vmatprep.subr.mxu0 0.0
    %400 = vmatpush1.msra.mxu0 0.0
    %401 = vmatprep.subr.mxu0 0.0
    %402 = vmatpush1.msra.mxu0 0.0
    %403 = vmatprep.subr.mxu0 0.0
    %404 = vmatpush1.msra.mxu0 0.0
    %405 = vmatprep.subr.mxu0 0.0
    %406 = vmatpush1.msra.mxu0 0.0
    %407 = vmatprep.subr.mxu0 0.0
    %408 = vmatpush1.msra.mxu0 0.0
    %409 = vmatprep.subr.mxu0 0.0
    %410 = vmatpush1.msra.mxu0 0.0
    %411 = vmatprep.subr.mxu0 0.0
    %412 = vmatpush1.msra.mxu0 0.0
    %413 = vmatprep.subr.mxu0 0.0
    %414 = vmatpush1.msra.mxu0 0.0
    %415 = vmatprep.subr.mxu0 0.0
    %416 = vmatpush1.msra.mxu0 0.0
    %417 = vmatprep.subr.mxu0 0.0
    %418 = vmatpush1.msra.mxu0 0.0
    %419 = vmatprep.subr.mxu0 0.0
    %420 = vmatpush1.msra.mxu0 0.0
    %421 = vmatprep.subr.mxu0 0.0
    %422 = vmatpush1.msra.mxu0 0.0
    %423 = vmatprep.subr.mxu0 0.0
    %424 = vmatpush1.msra.mxu0 0.0
    %425 = vmatprep.subr.mxu0 0.0
    %426 = vmatpush1.msra.mxu0 0.0
    %427 = vmatprep.subr.mxu0 0.0
    %428 = vmatpush1.msra.mxu0 0.0
    %429 = vmatprep.subr.mxu0 0.0
    %430 = vmatpush1.msra.mxu0 0.0
    %431 = vmatprep.subr.mxu0 0.0
    %432 = vmatpush1.msra.mxu0 0.0
    %433 = vmatprep.subr.mxu0 0.0
    %434 = vmatpush1.msra.mxu0 0.0
    %435 = vmatprep.subr.mxu0 0.0
    %436 = vmatpush1.msra.mxu0 0.0
    %437 = vmatprep.subr.mxu0 0.0
    %438 = vmatpush1.msra.mxu0 0.0
    %439 = vmatprep.subr.mxu0 0.0
    %440 = vmatpush1.msra.mxu0 0.0
    %441 = vmatprep.subr.mxu0 0.0
    %442 = vmatpush1.msra.mxu0 0.0
    %443 = vmatprep.subr.mxu0 0.0
    %444 = vmatpush1.msra.mxu0 0.0
    %445 = vmatprep.mubr.f32.mxu0 0.0
    %446 = vmatmul.mubr.f32.gmra.mrb[0].mxu0 %v308
    %v447 = vpop.f32.mrb[0].mxu0
    %v448 = vadd.f32 0.0, %v447
    %v449 = vpop.f32.mrb[0].mxu0
    %450 = vdwg.mxu0
    %v452 = vrot.slane %v448, 2
    %v454 = vadd.f32 %v230, %v452
    %v455 = vxor.u32 %v380, 2147483648
    %v456 = vmul.f32 %v455, 1.442695
    %v457 = vpow.pop %v456
    %v458 = vadd.f32 %v457, 1.0
    %v459 = vrcp.pop %v458
    %v460 = vmul.f32 1.0, %v459
    %v461 = vtanh.pop %v380
    %v462 = vmul.f32 %v460, 0.0
    %464 = vrot.lane.b32.xlu0 %v461, 64
    %v465 = vpop.permute.xlu0 %464
    %v467 = vmul.f32 %v460, %v465
    %469 = vrot.lane.b32.xlu0 %v467, 32
    %v470 = vpop.permute.xlu0 %469
    %v472 = vadd.f32 %v462, %v470
    %v473 = vtanh.pop %v472
    %475 = vrot.lane.b32.xlu0 %v473, 64
    %v476 = vpop.permute.xlu0 %475
    %v478 = vmul.f32 %v460, %v476
    %v479 = vxor.u32 %v454, 2147483648
    %v480 = vmul.f32 %v479, 1.442695
    %v481 = vpow.pop %v480
    %v482 = vadd.f32 %v481, 1.0
    %v483 = vrcp.pop %v482
    %v484 = vmul.f32 1.0, %v483
    %v485 = vtanh.pop %v454
    %v486 = vmul.f32 %v484, 0.0
    %488 = vrot.lane.b32.xlu0 %v485, 64
    %v489 = vpop.permute.xlu0 %488
    %v491 = vmul.f32 %v484, %v489
    %493 = vrot.lane.b32.xlu0 %v491, 32
    %v494 = vpop.permute.xlu0 %493
    %v496 = vadd.f32 %v486, %v494
    %v497 = vtanh.pop %v496
    %499 = vrot.lane.b32.xlu0 %v497, 64
    %v500 = vpop.permute.xlu0 %499
    %v502 = vmul.f32 %v484, %v500
    %504 = vrot.lane.b32.xlu0 %v478, 32
    %v505 = vpop.permute.xlu0 %504
    %v506 = vsel %vm150, %v505, 0
    %508 = vmatprep.subr.mxu0 0.0
    %509 = vmatpush1.msra.mxu0 %v63
    %510 = vmatprep.subr.mxu0 0.0
    %511 = vmatpush1.msra.mxu0 %v64
    %512 = vmatprep.subr.mxu0 0.0
    %513 = vmatpush1.msra.mxu0 %v65
    %514 = vmatprep.subr.mxu0 0.0
    %515 = vmatpush1.msra.mxu0 %v66
    %516 = vmatprep.subr.mxu0 0.0
    %517 = vmatpush1.msra.mxu0 0.0
    %518 = vmatprep.subr.mxu0 0.0
    %519 = vmatpush1.msra.mxu0 0.0
    %520 = vmatprep.subr.mxu0 0.0
    %521 = vmatpush1.msra.mxu0 0.0
    %522 = vmatprep.subr.mxu0 0.0
    %523 = vmatpush1.msra.mxu0 0.0
    %524 = vmatprep.subr.mxu0 0.0
    %525 = vmatpush1.msra.mxu0 0.0
    %526 = vmatprep.subr.mxu0 0.0
    %527 = vmatpush1.msra.mxu0 0.0
    %528 = vmatprep.subr.mxu0 0.0
    %529 = vmatpush1.msra.mxu0 0.0
    %530 = vmatprep.subr.mxu0 0.0
    %531 = vmatpush1.msra.mxu0 0.0
    %532 = vmatprep.subr.mxu0 0.0
    %533 = vmatpush1.msra.mxu0 0.0
    %534 = vmatprep.subr.mxu0 0.0
    %535 = vmatpush1.msra.mxu0 0.0
    %536 = vmatprep.subr.mxu0 0.0
    %537 = vmatpush1.msra.mxu0 0.0
    %538 = vmatprep.subr.mxu0 0.0
    %539 = vmatpush1.msra.mxu0 0.0
    %540 = vmatprep.subr.mxu0 0.0
    %541 = vmatpush1.msra.mxu0 0.0
    %542 = vmatprep.subr.mxu0 0.0
    %543 = vmatpush1.msra.mxu0 0.0
    %544 = vmatprep.subr.mxu0 0.0
    %545 = vmatpush1.msra.mxu0 0.0
    %546 = vmatprep.subr.mxu0 0.0
    %547 = vmatpush1.msra.mxu0 0.0
    %548 = vmatprep.subr.mxu0 0.0
    %549 = vmatpush1.msra.mxu0 0.0
    %550 = vmatprep.subr.mxu0 0.0
    %551 = vmatpush1.msra.mxu0 0.0
    %552 = vmatprep.subr.mxu0 0.0
    %553 = vmatpush1.msra.mxu0 0.0
    %554 = vmatprep.subr.mxu0 0.0
    %555 = vmatpush1.msra.mxu0 0.0
    %556 = vmatprep.subr.mxu0 0.0
    %557 = vmatpush1.msra.mxu0 0.0
    %558 = vmatprep.subr.mxu0 0.0
    %559 = vmatpush1.msra.mxu0 0.0
    %560 = vmatprep.subr.mxu0 0.0
    %561 = vmatpush1.msra.mxu0 0.0
    %562 = vmatprep.subr.mxu0 0.0
    %563 = vmatpush1.msra.mxu0 0.0
    %564 = vmatprep.subr.mxu0 0.0
    %565 = vmatpush1.msra.mxu0 0.0
    %566 = vmatprep.subr.mxu0 0.0
    %567 = vmatpush1.msra.mxu0 0.0
    %568 = vmatprep.subr.mxu0 0.0
    %569 = vmatpush1.msra.mxu0 0.0
    %570 = vmatprep.subr.mxu0 0.0
    %571 = vmatpush1.msra.mxu0 0.0
    %572 = vmatprep.mubr.f32.mxu0 0.0
    %573 = vmatmul.mubr.f32.gmra.mrb[0].mxu0 %v506
    %v574 = vpop.f32.mrb[0].mxu0
    %v575 = vadd.f32 0.0, %v574
    %v576 = vpop.f32.mrb[0].mxu0
    %577 = vdwg.mxu0
    %v579 = vrot.slane %v575, 6
    %v581 = vadd.f32 %v222, %v579
    %v583 = vrot.slane %v502, 6
    %584 = vrot.lane.b32.xlu0 %v583, 32
    %v585 = vpop.permute.xlu0 %584
    %v586 = vsel %vm150, %v585, 0
    %588 = vmatprep.subr.mxu0 0.0
    %589 = vmatpush1.msra.mxu0 %v67
    %590 = vmatprep.subr.mxu0 0.0
    %591 = vmatpush1.msra.mxu0 %v68
    %592 = vmatprep.subr.mxu0 0.0
    %593 = vmatpush1.msra.mxu0 %v69
    %594 = vmatprep.subr.mxu0 0.0
    %595 = vmatpush1.msra.mxu0 %v70
    %596 = vmatprep.subr.mxu0 0.0
    %597 = vmatpush1.msra.mxu0 0.0
    %598 = vmatprep.subr.mxu0 0.0
    %599 = vmatpush1.msra.mxu0 0.0
    %600 = vmatprep.subr.mxu0 0.0
    %601 = vmatpush1.msra.mxu0 0.0
    %602 = vmatprep.subr.mxu0 0.0
    %603 = vmatpush1.msra.mxu0 0.0
    %604 = vmatprep.subr.mxu0 0.0
    %605 = vmatpush1.msra.mxu0 0.0
    %606 = vmatprep.subr.mxu0 0.0
    %607 = vmatpush1.msra.mxu0 0.0
    %608 = vmatprep.subr.mxu0 0.0
    %609 = vmatpush1.msra.mxu0 0.0
    %610 = vmatprep.subr.mxu0 0.0
    %611 = vmatpush1.msra.mxu0 0.0
    %612 = vmatprep.subr.mxu0 0.0
    %613 = vmatpush1.msra.mxu0 0.0
    %614 = vmatprep.subr.mxu0 0.0
    %615 = vmatpush1.msra.mxu0 0.0
    %616 = vmatprep.subr.mxu0 0.0
    %617 = vmatpush1.msra.mxu0 0.0
    %618 = vmatprep.subr.mxu0 0.0
    %619 = vmatpush1.msra.mxu0 0.0
    %620 = vmatprep.subr.mxu0 0.0
    %621 = vmatpush1.msra.mxu0 0.0
    %622 = vmatprep.subr.mxu0 0.0
    %623 = vmatpush1.msra.mxu0 0.0
    %624 = vmatprep.subr.mxu0 0.0
    %625 = vmatpush1.msra.mxu0 0.0
    %626 = vmatprep.subr.mxu0 0.0
    %627 = vmatpush1.msra.mxu0 0.0
    %628 = vmatprep.subr.mxu0 0.0
    %629 = vmatpush1.msra.mxu0 0.0
    %630 = vmatprep.subr.mxu0 0.0
    %631 = vmatpush1.msra.mxu0 0.0
    %632 = vmatprep.subr.mxu0 0.0
    %633 = vmatpush1.msra.mxu0 0.0
    %634 = vmatprep.subr.mxu0 0.0
    %635 = vmatpush1.msra.mxu0 0.0
    %636 = vmatprep.subr.mxu0 0.0
    %637 = vmatpush1.msra.mxu0 0.0
    %638 = vmatprep.subr.mxu0 0.0
    %639 = vmatpush1.msra.mxu0 0.0
    %640 = vmatprep.subr.mxu0 0.0
    %641 = vmatpush1.msra.mxu0 0.0
    %642 = vmatprep.subr.mxu0 0.0
    %643 = vmatpush1.msra.mxu0 0.0
    %644 = vmatprep.subr.mxu0 0.0
    %645 = vmatpush1.msra.mxu0 0.0
    %646 = vmatprep.subr.mxu0 0.0
    %647 = vmatpush1.msra.mxu0 0.0
    %648 = vmatprep.subr.mxu0 0.0
    %649 = vmatpush1.msra.mxu0 0.0
    %650 = vmatprep.subr.mxu0 0.0
    %651 = vmatpush1.msra.mxu0 0.0
    %652 = vmatprep.mubr.f32.mxu0 0.0
    %653 = vmatmul.mubr.f32.gmra.mrb[0].mxu0 %v586
    %v654 = vpop.f32.mrb[0].mxu0
    %v655 = vadd.f32 0.0, %v654
    %v656 = vpop.f32.mrb[0].mxu0
    %657 = vdwg.mxu0
    %v659 = vrot.slane %v655, 4
    %v661 = vadd.f32 %v230, %v659
    %v662 = vxor.u32 %v581, 2147483648
    %v663 = vmul.f32 %v662, 1.442695
    %v664 = vpow.pop %v663
    %v665 = vadd.f32 %v664, 1.0
    %v666 = vrcp.pop %v665
    %v667 = vmul.f32 1.0, %v666
    %v668 = vtanh.pop %v581
    %v670 = vrot.slane %v472, 6
    %v672 = vmul.f32 %v667, %v670
    %674 = vrot.lane.b32.xlu0 %v668, 64
    %v675 = vpop.permute.xlu0 %674
    %v677 = vmul.f32 %v667, %v675
    %679 = vrot.lane.b32.xlu0 %v677, 32
    %v680 = vpop.permute.xlu0 %679
    %v682 = vadd.f32 %v672, %v680
    %v683 = vtanh.pop %v682
    %685 = vrot.lane.b32.xlu0 %v683, 64
    %v686 = vpop.permute.xlu0 %685
    %v688 = vmul.f32 %v667, %v686
    %v689 = vxor.u32 %v661, 2147483648
    %v690 = vmul.f32 %v689, 1.442695
    %v691 = vpow.pop %v690
    %v692 = vadd.f32 %v691, 1.0
    %v693 = vrcp.pop %v692
    %v694 = vmul.f32 1.0, %v693
    %v695 = vtanh.pop %v661
    %v697 = vrot.slane %v496, 2
    %v699 = vmul.f32 %v694, %v697
    %701 = vrot.lane.b32.xlu0 %v695, 64
    %v702 = vpop.permute.xlu0 %701
    %v704 = vmul.f32 %v694, %v702
    %706 = vrot.lane.b32.xlu0 %v704, 32
    %v707 = vpop.permute.xlu0 %706
    %v709 = vadd.f32 %v699, %v707
    %v710 = vtanh.pop %v709
    %712 = vrot.lane.b32.xlu0 %v710, 64
    %v713 = vpop.permute.xlu0 %712
    %v715 = vmul.f32 %v694, %v713
    %v717 = vrot.slane %v688, 2
    %718 = vrot.lane.b32.xlu0 %v717, 32
    %v719 = vpop.permute.xlu0 %718
    %v720 = vsel %vm150, %v719, 0
    %722 = vmatprep.subr.mxu0 0.0
    %723 = vmatpush1.msra.mxu0 %v63
    %724 = vmatprep.subr.mxu0 0.0
    %725 = vmatpush1.msra.mxu0 %v64
    %726 = vmatprep.subr.mxu0 0.0
    %727 = vmatpush1.msra.mxu0 %v65
    %728 = vmatprep.subr.mxu0 0.0
    %729 = vmatpush1.msra.mxu0 %v66
    %730 = vmatprep.subr.mxu0 0.0
    %731 = vmatpush1.msra.mxu0 0.0
    %732 = vmatprep.subr.mxu0 0.0
    %733 = vmatpush1.msra.mxu0 0.0
    %734 = vmatprep.subr.mxu0 0.0
    %735 = vmatpush1.msra.mxu0 0.0
    %736 = vmatprep.subr.mxu0 0.0
    %737 = vmatpush1.msra.mxu0 0.0
    %738 = vmatprep.subr.mxu0 0.0
    %739 = vmatpush1.msra.mxu0 0.0
    %740 = vmatprep.subr.mxu0 0.0
    %741 = vmatpush1.msra.mxu0 0.0
    %742 = vmatprep.subr.mxu0 0.0
    %743 = vmatpush1.msra.mxu0 0.0
    %744 = vmatprep.subr.mxu0 0.0
    %745 = vmatpush1.msra.mxu0 0.0
    %746 = vmatprep.subr.mxu0 0.0
    %747 = vmatpush1.msra.mxu0 0.0
    %748 = vmatprep.subr.mxu0 0.0
    %749 = vmatpush1.msra.mxu0 0.0
    %750 = vmatprep.subr.mxu0 0.0
    %751 = vmatpush1.msra.mxu0 0.0
    %752 = vmatprep.subr.mxu0 0.0
    %753 = vmatpush1.msra.mxu0 0.0
    %754 = vmatprep.subr.mxu0 0.0
    %755 = vmatpush1.msra.mxu0 0.0
    %756 = vmatprep.subr.mxu0 0.0
    %757 = vmatpush1.msra.mxu0 0.0
    %758 = vmatprep.subr.mxu0 0.0
    %759 = vmatpush1.msra.mxu0 0.0
    %760 = vmatprep.subr.mxu0 0.0
    %761 = vmatpush1.msra.mxu0 0.0
    %762 = vmatprep.subr.mxu0 0.0
    %763 = vmatpush1.msra.mxu0 0.0
    %764 = vmatprep.subr.mxu0 0.0
    %765 = vmatpush1.msra.mxu0 0.0
    %766 = vmatprep.subr.mxu0 0.0
    %767 = vmatpush1.msra.mxu0 0.0
    %768 = vmatprep.subr.mxu0 0.0
    %769 = vmatpush1.msra.mxu0 0.0
    %770 = vmatprep.subr.mxu0 0.0
    %771 = vmatpush1.msra.mxu0 0.0
    %772 = vmatprep.subr.mxu0 0.0
    %773 = vmatpush1.msra.mxu0 0.0
    %774 = vmatprep.subr.mxu0 0.0
    %775 = vmatpush1.msra.mxu0 0.0
    %776 = vmatprep.subr.mxu0 0.0
    %777 = vmatpush1.msra.mxu0 0.0
    %778 = vmatprep.subr.mxu0 0.0
    %779 = vmatpush1.msra.mxu0 0.0
    %780 = vmatprep.subr.mxu0 0.0
    %781 = vmatpush1.msra.mxu0 0.0
    %782 = vmatprep.subr.mxu0 0.0
    %783 = vmatpush1.msra.mxu0 0.0
    %784 = vmatprep.subr.mxu0 0.0
    %785 = vmatpush1.msra.mxu0 0.0
    %786 = vmatprep.mubr.f32.mxu0 0.0
    %787 = vmatmul.mubr.f32.gmra.mrb[0].mxu0 %v720
    %v788 = vpop.f32.mrb[0].mxu0
    %v789 = vadd.f32 0.0, %v788
    %v790 = vpop.f32.mrb[0].mxu0
    %791 = vdwg.mxu0
    %v793 = vrot.slane %v789, 4
    %v795 = vadd.f32 %v222, %v793
    %v797 = vrot.slane %v715, 4
    %798 = vrot.lane.b32.xlu0 %v797, 32
    %v799 = vpop.permute.xlu0 %798
    %v800 = vsel %vm150, %v799, 0
    %802 = vmatprep.subr.mxu0 0.0
    %803 = vmatpush1.msra.mxu0 %v67
    %804 = vmatprep.subr.mxu0 0.0
    %805 = vmatpush1.msra.mxu0 %v68
    %806 = vmatprep.subr.mxu0 0.0
    %807 = vmatpush1.msra.mxu0 %v69
    %808 = vmatprep.subr.mxu0 0.0
    %809 = vmatpush1.msra.mxu0 %v70
    %810 = vmatprep.subr.mxu0 0.0
    %811 = vmatpush1.msra.mxu0 0.0
    %812 = vmatprep.subr.mxu0 0.0
    %813 = vmatpush1.msra.mxu0 0.0
    %814 = vmatprep.subr.mxu0 0.0
    %815 = vmatpush1.msra.mxu0 0.0
    %816 = vmatprep.subr.mxu0 0.0
    %817 = vmatpush1.msra.mxu0 0.0
    %818 = vmatprep.subr.mxu0 0.0
    %819 = vmatpush1.msra.mxu0 0.0
    %820 = vmatprep.subr.mxu0 0.0
    %821 = vmatpush1.msra.mxu0 0.0
    %822 = vmatprep.subr.mxu0 0.0
    %823 = vmatpush1.msra.mxu0 0.0
    %824 = vmatprep.subr.mxu0 0.0
    %825 = vmatpush1.msra.mxu0 0.0
    %826 = vmatprep.subr.mxu0 0.0
    %827 = vmatpush1.msra.mxu0 0.0
    %828 = vmatprep.subr.mxu0 0.0
    %829 = vmatpush1.msra.mxu0 0.0
    %830 = vmatprep.subr.mxu0 0.0
    %831 = vmatpush1.msra.mxu0 0.0
    %832 = vmatprep.subr.mxu0 0.0
    %833 = vmatpush1.msra.mxu0 0.0
    %834 = vmatprep.subr.mxu0 0.0
    %835 = vmatpush1.msra.mxu0 0.0
    %836 = vmatprep.subr.mxu0 0.0
    %837 = vmatpush1.msra.mxu0 0.0
    %838 = vmatprep.subr.mxu0 0.0
    %839 = vmatpush1.msra.mxu0 0.0
    %840 = vmatprep.subr.mxu0 0.0
    %841 = vmatpush1.msra.mxu0 0.0
    %842 = vmatprep.subr.mxu0 0.0
    %843 = vmatpush1.msra.mxu0 0.0
    %844 = vmatprep.subr.mxu0 0.0
    %845 = vmatpush1.msra.mxu0 0.0
    %846 = vmatprep.subr.mxu0 0.0
    %847 = vmatpush1.msra.mxu0 0.0
    %848 = vmatprep.subr.mxu0 0.0
    %849 = vmatpush1.msra.mxu0 0.0
    %850 = vmatprep.subr.mxu0 0.0
    %851 = vmatpush1.msra.mxu0 0.0
    %852 = vmatprep.subr.mxu0 0.0
    %853 = vmatpush1.msra.mxu0 0.0
    %854 = vmatprep.subr.mxu0 0.0
    %855 = vmatpush1.msra.mxu0 0.0
    %856 = vmatprep.subr.mxu0 0.0
    %857 = vmatpush1.msra.mxu0 0.0
    %858 = vmatprep.subr.mxu0 0.0
    %859 = vmatpush1.msra.mxu0 0.0
    %860 = vmatprep.subr.mxu0 0.0
    %861 = vmatpush1.msra.mxu0 0.0
    %862 = vmatprep.subr.mxu0 0.0
    %863 = vmatpush1.msra.mxu0 0.0
    %864 = vmatprep.subr.mxu0 0.0
    %865 = vmatpush1.msra.mxu0 0.0
    %866 = vmatprep.mubr.f32.mxu0 0.0
    %867 = vmatmul.mubr.f32.gmra.mrb[0].mxu0 %v800
    %v868 = vpop.f32.mrb[0].mxu0
    %v869 = vadd.f32 0.0, %v868
    %v870 = vpop.f32.mrb[0].mxu0
    %871 = vdwg.mxu0
    %v873 = vrot.slane %v869, 6
    %v875 = vadd.f32 %v230, %v873
    %v876 = vxor.u32 %v795, 2147483648
    %v877 = vmul.f32 %v876, 1.442695
    %v878 = vpow.pop %v877
    %v879 = vadd.f32 %v878, 1.0
    %v880 = vrcp.pop %v879
    %v881 = vmul.f32 1.0, %v880
    %v882 = vtanh.pop %v795
    %v884 = vrot.slane %v682, 6
    %v886 = vmul.f32 %v881, %v884
    %888 = vrot.lane.b32.xlu0 %v882, 64
    %v889 = vpop.permute.xlu0 %888
    %v891 = vmul.f32 %v881, %v889
    %893 = vrot.lane.b32.xlu0 %v891, 32
    %v894 = vpop.permute.xlu0 %893
    %v896 = vadd.f32 %v886, %v894
    %v897 = vtanh.pop %v896
    %899 = vrot.lane.b32.xlu0 %v897, 64
    %v900 = vpop.permute.xlu0 %899
    %v902 = vmul.f32 %v881, %v900
    %v903 = vxor.u32 %v875, 2147483648
    %v904 = vmul.f32 %v903, 1.442695
    %v905 = vpow.pop %v904
    %v906 = vadd.f32 %v905, 1.0
    %v907 = vrcp.pop %v906
    %v908 = vmul.f32 1.0, %v907
    %v909 = vtanh.pop %v875
    %v911 = vrot.slane %v709, 2
    %v913 = vmul.f32 %v908, %v911
    %915 = vrot.lane.b32.xlu0 %v909, 64
    %v916 = vpop.permute.xlu0 %915
    %v918 = vmul.f32 %v908, %v916
    %920 = vrot.lane.b32.xlu0 %v918, 32
    %v921 = vpop.permute.xlu0 %920
    %v923 = vadd.f32 %v913, %v921
    %v924 = vtanh.pop %v923
    %926 = vrot.lane.b32.xlu0 %v924, 64
    %v927 = vpop.permute.xlu0 %926
    %v929 = vmul.f32 %v908, %v927
    %v931 = vrot.slane %v902, 4
    %932 = vrot.lane.b32.xlu0 %v931, 32
    %v933 = vpop.permute.xlu0 %932
    %v934 = vsel %vm150, %v933, 0
    %936 = vmatprep.subr.mxu0 0.0
    %937 = vmatpush1.msra.mxu0 %v63
    %938 = vmatprep.subr.mxu0 0.0
    %939 = vmatpush1.msra.mxu0 %v64
    %940 = vmatprep.subr.mxu0 0.0
    %941 = vmatpush1.msra.mxu0 %v65
    %942 = vmatprep.subr.mxu0 0.0
    %943 = vmatpush1.msra.mxu0 %v66
    %944 = vmatprep.subr.mxu0 0.0
    %945 = vmatpush1.msra.mxu0 0.0
    %946 = vmatprep.subr.mxu0 0.0
    %947 = vmatpush1.msra.mxu0 0.0
    %948 = vmatprep.subr.mxu0 0.0
    %949 = vmatpush1.msra.mxu0 0.0
    %950 = vmatprep.subr.mxu0 0.0
    %951 = vmatpush1.msra.mxu0 0.0
    %952 = vmatprep.subr.mxu0 0.0
    %953 = vmatpush1.msra.mxu0 0.0
    %954 = vmatprep.subr.mxu0 0.0
    %955 = vmatpush1.msra.mxu0 0.0
    %956 = vmatprep.subr.mxu0 0.0
    %957 = vmatpush1.msra.mxu0 0.0
    %958 = vmatprep.subr.mxu0 0.0
    %959 = vmatpush1.msra.mxu0 0.0
    %960 = vmatprep.subr.mxu0 0.0
    %961 = vmatpush1.msra.mxu0 0.0
    %962 = vmatprep.subr.mxu0 0.0
    %963 = vmatpush1.msra.mxu0 0.0
    %964 = vmatprep.subr.mxu0 0.0
    %965 = vmatpush1.msra.mxu0 0.0
    %966 = vmatprep.subr.mxu0 0.0
    %967 = vmatpush1.msra.mxu0 0.0
    %968 = vmatprep.subr.mxu0 0.0
    %969 = vmatpush1.msra.mxu0 0.0
    %970 = vmatprep.subr.mxu0 0.0
    %971 = vmatpush1.msra.mxu0 0.0
    %972 = vmatprep.subr.mxu0 0.0
    %973 = vmatpush1.msra.mxu0 0.0
    %974 = vmatprep.subr.mxu0 0.0
    %975 = vmatpush1.msra.mxu0 0.0
    %976 = vmatprep.subr.mxu0 0.0
    %977 = vmatpush1.msra.mxu0 0.0
    %978 = vmatprep.subr.mxu0 0.0
    %979 = vmatpush1.msra.mxu0 0.0
    %980 = vmatprep.subr.mxu0 0.0
    %981 = vmatpush1.msra.mxu0 0.0
    %982 = vmatprep.subr.mxu0 0.0
    %983 = vmatpush1.msra.mxu0 0.0
    %984 = vmatprep.subr.mxu0 0.0
    %985 = vmatpush1.msra.mxu0 0.0
    %986 = vmatprep.subr.mxu0 0.0
    %987 = vmatpush1.msra.mxu0 0.0
    %988 = vmatprep.subr.mxu0 0.0
    %989 = vmatpush1.msra.mxu0 0.0
    %990 = vmatprep.subr.mxu0 0.0
    %991 = vmatpush1.msra.mxu0 0.0
    %992 = vmatprep.subr.mxu0 0.0
    %993 = vmatpush1.msra.mxu0 0.0
    %994 = vmatprep.subr.mxu0 0.0
    %995 = vmatpush1.msra.mxu0 0.0
    %996 = vmatprep.subr.mxu0 0.0
    %997 = vmatpush1.msra.mxu0 0.0
    %998 = vmatprep.subr.mxu0 0.0
    %999 = vmatpush1.msra.mxu0 0.0
    %1000 = vmatprep.mubr.f32.mxu0 0.0
    %1001 = vmatmul.mubr.f32.gmra.mrb[0].mxu0 %v934
    %v1002 = vpop.f32.mrb[0].mxu0
    %v1003 = vadd.f32 0.0, %v1002
    %v1004 = vpop.f32.mrb[0].mxu0
    %1005 = vdwg.mxu0
    %v1007 = vrot.slane %v1003, 2
    %v1009 = vadd.f32 %v222, %v1007
    %v1011 = vrot.slane %v929, 2
    %1012 = vrot.lane.b32.xlu0 %v1011, 32
    %v1013 = vpop.permute.xlu0 %1012
    %v1014 = vsel %vm150, %v1013, 0
    %1016 = vmatprep.subr.mxu0 0.0
    %1017 = vmatpush1.msra.mxu0 %v67
    %1018 = vmatprep.subr.mxu0 0.0
    %1019 = vmatpush1.msra.mxu0 %v68
    %1020 = vmatprep.subr.mxu0 0.0
    %1021 = vmatpush1.msra.mxu0 %v69
    %1022 = vmatprep.subr.mxu0 0.0
    %1023 = vmatpush1.msra.mxu0 %v70
    %1024 = vmatprep.subr.mxu0 0.0
    %1025 = vmatpush1.msra.mxu0 0.0
    %1026 = vmatprep.subr.mxu0 0.0
    %1027 = vmatpush1.msra.mxu0 0.0
    %1028 = vmatprep.subr.mxu0 0.0
    %1029 = vmatpush1.msra.mxu0 0.0
    %1030 = vmatprep.subr.mxu0 0.0
    %1031 = vmatpush1.msra.mxu0 0.0
    %1032 = vmatprep.subr.mxu0 0.0
    %1033 = vmatpush1.msra.mxu0 0.0
    %1034 = vmatprep.subr.mxu0 0.0
    %1035 = vmatpush1.msra.mxu0 0.0
    %1036 = vmatprep.subr.mxu0 0.0
    %1037 = vmatpush1.msra.mxu0 0.0
    %1038 = vmatprep.subr.mxu0 0.0
    %1039 = vmatpush1.msra.mxu0 0.0
    %1040 = vmatprep.subr.mxu0 0.0
    %1041 = vmatpush1.msra.mxu0 0.0
    %1042 = vmatprep.subr.mxu0 0.0
    %1043 = vmatpush1.msra.mxu0 0.0
    %1044 = vmatprep.subr.mxu0 0.0
    %1045 = vmatpush1.msra.mxu0 0.0
    %1046 = vmatprep.subr.mxu0 0.0
    %1047 = vmatpush1.msra.mxu0 0.0
    %1048 = vmatprep.subr.mxu0 0.0
    %1049 = vmatpush1.msra.mxu0 0.0
    %1050 = vmatprep.subr.mxu0 0.0
    %1051 = vmatpush1.msra.mxu0 0.0
    %1052 = vmatprep.subr.mxu0 0.0
    %1053 = vmatpush1.msra.mxu0 0.0
    %1054 = vmatprep.subr.mxu0 0.0
    %1055 = vmatpush1.msra.mxu0 0.0
    %1056 = vmatprep.subr.mxu0 0.0
    %1057 = vmatpush1.msra.mxu0 0.0
    %1058 = vmatprep.subr.mxu0 0.0
    %1059 = vmatpush1.msra.mxu0 0.0
    %1060 = vmatprep.subr.mxu0 0.0
    %1061 = vmatpush1.msra.mxu0 0.0
    %1062 = vmatprep.subr.mxu0 0.0
    %1063 = vmatpush1.msra.mxu0 0.0
    %1064 = vmatprep.subr.mxu0 0.0
    %1065 = vmatpush1.msra.mxu0 0.0
    %1066 = vmatprep.subr.mxu0 0.0
    %1067 = vmatpush1.msra.mxu0 0.0
    %1068 = vmatprep.subr.mxu0 0.0
    %1069 = vmatpush1.msra.mxu0 0.0
    %1070 = vmatprep.subr.mxu0 0.0
    %1071 = vmatpush1.msra.mxu0 0.0
    %1072 = vmatprep.subr.mxu0 0.0
    %1073 = vmatpush1.msra.mxu0 0.0
    %1074 = vmatprep.subr.mxu0 0.0
    %1075 = vmatpush1.msra.mxu0 0.0
    %1076 = vmatprep.subr.mxu0 0.0
    %1077 = vmatpush1.msra.mxu0 0.0
    %1078 = vmatprep.subr.mxu0 0.0
    %1079 = vmatpush1.msra.mxu0 0.0
    %1080 = vmatprep.mubr.f32.mxu0 0.0
    %1081 = vmatmul.mubr.f32.gmra.mrb[0].mxu0 %v1014
    %v1082 = vpop.f32.mrb[0].mxu0
    %v1083 = vadd.f32 0.0, %v1082
    %v1084 = vpop.f32.mrb[0].mxu0
    %1085 = vdwg.mxu0
    %v1086 = vadd.f32 %v230, %v1083
    %v1087 = vxor.u32 %v1009, 2147483648
    %v1088 = vmul.f32 %v1087, 1.442695
    %v1089 = vpow.pop %v1088
    %v1090 = vadd.f32 %v1089, 1.0
    %v1091 = vrcp.pop %v1090
    %v1092 = vmul.f32 1.0, %v1091
    %v1093 = vtanh.pop %v1009
    %v1095 = vrot.slane %v896, 6
    %v1097 = vmul.f32 %v1092, %v1095
    %1099 = vrot.lane.b32.xlu0 %v1093, 64
    %v1100 = vpop.permute.xlu0 %1099
    %v1102 = vmul.f32 %v1092, %v1100
    %1104 = vrot.lane.b32.xlu0 %v1102, 32
    %v1105 = vpop.permute.xlu0 %1104
    %v1107 = vadd.f32 %v1097, %v1105
    %v1108 = vtanh.pop %v1107
    %1110 = vrot.lane.b32.xlu0 %v1108, 64
    %v1111 = vpop.permute.xlu0 %1110
    %v1113 = vmul.f32 %v1092, %v1111
    %v1114 = vxor.u32 %v1086, 2147483648
    %v1115 = vmul.f32 %v1114, 1.442695
    %v1116 = vpow.pop %v1115
    %v1117 = vadd.f32 %v1116, 1.0
    %v1118 = vrcp.pop %v1117
    %v1119 = vmul.f32 1.0, %v1118
    %v1120 = vtanh.pop %v1086
    %v1122 = vrot.slane %v923, 2
    %v1124 = vmul.f32 %v1119, %v1122
    %1126 = vrot.lane.b32.xlu0 %v1120, 64
    %v1127 = vpop.permute.xlu0 %1126
    %v1129 = vmul.f32 %v1119, %v1127
    %1131 = vrot.lane.b32.xlu0 %v1129, 32
    %v1132 = vpop.permute.xlu0 %1131
    %v1134 = vadd.f32 %v1124, %v1132
    %v1135 = vtanh.pop %v1134
    %1137 = vrot.lane.b32.xlu0 %v1135, 64
    %v1138 = vpop.permute.xlu0 %1137
    %v1140 = vmul.f32 %v1119, %v1138
    %v1142 = vrot.slane %v1113, 6
    %1143 = vrot.lane.b32.xlu0 %v1142, 32
    %v1144 = vpop.permute.xlu0 %1143
    %v1145 = vsel %vm150, %v1144, 0
    %1147 = vmatprep.subr.mxu0 0.0
    %1148 = vmatpush1.msra.mxu0 %v63
    %1149 = vmatprep.subr.mxu0 0.0
    %1150 = vmatpush1.msra.mxu0 %v64
    %1151 = vmatprep.subr.mxu0 0.0
    %1152 = vmatpush1.msra.mxu0 %v65
    %1153 = vmatprep.subr.mxu0 0.0
    %1154 = vmatpush1.msra.mxu0 %v66
    %1155 = vmatprep.subr.mxu0 0.0
    %1156 = vmatpush1.msra.mxu0 0.0
    %1157 = vmatprep.subr.mxu0 0.0
    %1158 = vmatpush1.msra.mxu0 0.0
    %1159 = vmatprep.subr.mxu0 0.0
    %1160 = vmatpush1.msra.mxu0 0.0
    %1161 = vmatprep.subr.mxu0 0.0
    %1162 = vmatpush1.msra.mxu0 0.0
    %1163 = vmatprep.subr.mxu0 0.0
    %1164 = vmatpush1.msra.mxu0 0.0
    %1165 = vmatprep.subr.mxu0 0.0
    %1166 = vmatpush1.msra.mxu0 0.0
    %1167 = vmatprep.subr.mxu0 0.0
    %1168 = vmatpush1.msra.mxu0 0.0
    %1169 = vmatprep.subr.mxu0 0.0
    %1170 = vmatpush1.msra.mxu0 0.0
    %1171 = vmatprep.subr.mxu0 0.0
    %1172 = vmatpush1.msra.mxu0 0.0
    %1173 = vmatprep.subr.mxu0 0.0
    %1174 = vmatpush1.msra.mxu0 0.0
    %1175 = vmatprep.subr.mxu0 0.0
    %1176 = vmatpush1.msra.mxu0 0.0
    %1177 = vmatprep.subr.mxu0 0.0
    %1178 = vmatpush1.msra.mxu0 0.0
    %1179 = vmatprep.subr.mxu0 0.0
    %1180 = vmatpush1.msra.mxu0 0.0
    %1181 = vmatprep.subr.mxu0 0.0
    %1182 = vmatpush1.msra.mxu0 0.0
    %1183 = vmatprep.subr.mxu0 0.0
    %1184 = vmatpush1.msra.mxu0 0.0
    %1185 = vmatprep.subr.mxu0 0.0
    %1186 = vmatpush1.msra.mxu0 0.0
    %1187 = vmatprep.subr.mxu0 0.0
    %1188 = vmatpush1.msra.mxu0 0.0
    %1189 = vmatprep.subr.mxu0 0.0
    %1190 = vmatpush1.msra.mxu0 0.0
    %1191 = vmatprep.subr.mxu0 0.0
    %1192 = vmatpush1.msra.mxu0 0.0
    %1193 = vmatprep.subr.mxu0 0.0
    %1194 = vmatpush1.msra.mxu0 0.0
    %1195 = vmatprep.subr.mxu0 0.0
    %1196 = vmatpush1.msra.mxu0 0.0
    %1197 = vmatprep.subr.mxu0 0.0
    %1198 = vmatpush1.msra.mxu0 0.0
    %1199 = vmatprep.subr.mxu0 0.0
    %1200 = vmatpush1.msra.mxu0 0.0
    %1201 = vmatprep.subr.mxu0 0.0
    %1202 = vmatpush1.msra.mxu0 0.0
    %1203 = vmatprep.subr.mxu0 0.0
    %1204 = vmatpush1.msra.mxu0 0.0
    %1205 = vmatprep.subr.mxu0 0.0
    %1206 = vmatpush1.msra.mxu0 0.0
    %1207 = vmatprep.subr.mxu0 0.0
    %1208 = vmatpush1.msra.mxu0 0.0
    %1209 = vmatprep.subr.mxu0 0.0
    %1210 = vmatpush1.msra.mxu0 0.0
    %1211 = vmatprep.mubr.f32.mxu0 0.0
    %1212 = vmatmul.mubr.f32.gmra.mrb[0].mxu0 %v1145
    %v1213 = vpop.f32.mrb[0].mxu0
    %v1214 = vadd.f32 0.0, %v1213
    %v1215 = vpop.f32.mrb[0].mxu0
    %1216 = vdwg.mxu0
    %v1217 = vadd.f32 %v228, %v1214
    %1219 = vrot.lane.b32.xlu0 %v1140, 32
    %v1220 = vpop.permute.xlu0 %1219
    %v1221 = vsel %vm150, %v1220, 0
    %1223 = vmatprep.subr.mxu0 0.0
    %1224 = vmatpush1.msra.mxu0 %v67
    %1225 = vmatprep.subr.mxu0 0.0
    %1226 = vmatpush1.msra.mxu0 %v68
    %1227 = vmatprep.subr.mxu0 0.0
    %1228 = vmatpush1.msra.mxu0 %v69
    %1229 = vmatprep.subr.mxu0 0.0
    %1230 = vmatpush1.msra.mxu0 %v70
    %1231 = vmatprep.subr.mxu0 0.0
    %1232 = vmatpush1.msra.mxu0 0.0
    %1233 = vmatprep.subr.mxu0 0.0
    %1234 = vmatpush1.msra.mxu0 0.0
    %1235 = vmatprep.subr.mxu0 0.0
    %1236 = vmatpush1.msra.mxu0 0.0
    %1237 = vmatprep.subr.mxu0 0.0
    %1238 = vmatpush1.msra.mxu0 0.0
    %1239 = vmatprep.subr.mxu0 0.0
    %1240 = vmatpush1.msra.mxu0 0.0
    %1241 = vmatprep.subr.mxu0 0.0
    %1242 = vmatpush1.msra.mxu0 0.0
    %1243 = vmatprep.subr.mxu0 0.0
    %1244 = vmatpush1.msra.mxu0 0.0
    %1245 = vmatprep.subr.mxu0 0.0
    %1246 = vmatpush1.msra.mxu0 0.0
    %1247 = vmatprep.subr.mxu0 0.0
    %1248 = vmatpush1.msra.mxu0 0.0
    %1249 = vmatprep.subr.mxu0 0.0
    %1250 = vmatpush1.msra.mxu0 0.0
    %1251 = vmatprep.subr.mxu0 0.0
    %1252 = vmatpush1.msra.mxu0 0.0
    %1253 = vmatprep.subr.mxu0 0.0
    %1254 = vmatpush1.msra.mxu0 0.0
    %1255 = vmatprep.subr.mxu0 0.0
    %1256 = vmatpush1.msra.mxu0 0.0
    %1257 = vmatprep.subr.mxu0 0.0
    %1258 = vmatpush1.msra.mxu0 0.0
    %1259 = vmatprep.subr.mxu0 0.0
    %1260 = vmatpush1.msra.mxu0 0.0
    %1261 = vmatprep.subr.mxu0 0.0
    %1262 = vmatpush1.msra.mxu0 0.0
    %1263 = vmatprep.subr.mxu0 0.0
    %1264 = vmatpush1.msra.mxu0 0.0
    %1265 = vmatprep.subr.mxu0 0.0
    %1266 = vmatpush1.msra.mxu0 0.0
    %1267 = vmatprep.subr.mxu0 0.0
    %1268 = vmatpush1.msra.mxu0 0.0
    %1269 = vmatprep.subr.mxu0 0.0
    %1270 = vmatpush1.msra.mxu0 0.0
    %1271 = vmatprep.subr.mxu0 0.0
    %1272 = vmatpush1.msra.mxu0 0.0
    %1273 = vmatprep.subr.mxu0 0.0
    %1274 = vmatpush1.msra.mxu0 0.0
    %1275 = vmatprep.subr.mxu0 0.0
    %1276 = vmatpush1.msra.mxu0 0.0
    %1277 = vmatprep.subr.mxu0 0.0
    %1278 = vmatpush1.msra.mxu0 0.0
    %1279 = vmatprep.subr.mxu0 0.0
    %1280 = vmatpush1.msra.mxu0 0.0
    %1281 = vmatprep.subr.mxu0 0.0
    %1282 = vmatpush1.msra.mxu0 0.0
    %1283 = vmatprep.subr.mxu0 0.0
    %1284 = vmatpush1.msra.mxu0 0.0
    %1285 = vmatprep.subr.mxu0 0.0
    %1286 = vmatpush1.msra.mxu0 0.0
    %1287 = vmatprep.mubr.f32.mxu0 0.0
    %1288 = vmatmul.mubr.f32.gmra.mrb[0].mxu0 %v1221
    %v1289 = vpop.f32.mrb[0].mxu0
    %v1290 = vadd.f32 0.0, %v1289
    %v1291 = vpop.f32.mrb[0].mxu0
    %1292 = vdwg.mxu0
    %v1294 = vrot.slane %v1290, 2
    %v1296 = vadd.f32 %v224, %v1294
    %v1297 = vxor.u32 %v1217, 2147483648
    %v1298 = vmul.f32 %v1297, 1.442695
    %v1299 = vpow.pop %v1298
    %v1300 = vadd.f32 %v1299, 1.0
    %v1301 = vrcp.pop %v1300
    %v1302 = vmul.f32 1.0, %v1301
    %v1303 = vtanh.pop %v1217
    %v1305 = vrot.slane %v1107, 6
    %v1307 = vmul.f32 %v1302, %v1305
    %1309 = vrot.lane.b32.xlu0 %v1303, 64
    %v1310 = vpop.permute.xlu0 %1309
    %v1312 = vmul.f32 %v1302, %v1310
    %1314 = vrot.lane.b32.xlu0 %v1312, 32
    %v1315 = vpop.permute.xlu0 %1314
    %v1317 = vadd.f32 %v1307, %v1315
    %v1318 = vtanh.pop %v1317
    %1320 = vrot.lane.b32.xlu0 %v1318, 64
    %v1321 = vpop.permute.xlu0 %1320
    %v1323 = vmul.f32 %v1302, %v1321
    %v1324 = vxor.u32 %v1296, 2147483648
    %v1325 = vmul.f32 %v1324, 1.442695
    %v1326 = vpow.pop %v1325
    %v1327 = vadd.f32 %v1326, 1.0
    %v1328 = vrcp.pop %v1327
    %v1329 = vmul.f32 1.0, %v1328
    %v1330 = vtanh.pop %v1296
    %v1332 = vrot.slane %v1134, 2
    %v1334 = vmul.f32 %v1329, %v1332
    %1336 = vrot.lane.b32.xlu0 %v1330, 64
    %v1337 = vpop.permute.xlu0 %1336
    %v1339 = vmul.f32 %v1329, %v1337
    %1341 = vrot.lane.b32.xlu0 %v1339, 32
    %v1342 = vpop.permute.xlu0 %1341
    %v1344 = vadd.f32 %v1334, %v1342
    %v1345 = vtanh.pop %v1344
    %1347 = vrot.lane.b32.xlu0 %v1345, 64
    %v1348 = vpop.permute.xlu0 %1347
    %v1350 = vmul.f32 %v1329, %v1348
    %1352 = vrot.lane.b32.xlu0 %v1323, 32
    %v1353 = vpop.permute.xlu0 %1352
    %v1354 = vsel %vm150, %v1353, 0
    %1356 = vmatprep.subr.mxu0 0.0
    %1357 = vmatpush1.msra.mxu0 %v63
    %1358 = vmatprep.subr.mxu0 0.0
    %1359 = vmatpush1.msra.mxu0 %v64
    %1360 = vmatprep.subr.mxu0 0.0
    %1361 = vmatpush1.msra.mxu0 %v65
    %1362 = vmatprep.subr.mxu0 0.0
    %1363 = vmatpush1.msra.mxu0 %v66
    %1364 = vmatprep.subr.mxu0 0.0
    %1365 = vmatpush1.msra.mxu0 0.0
    %1366 = vmatprep.subr.mxu0 0.0
    %1367 = vmatpush1.msra.mxu0 0.0
    %1368 = vmatprep.subr.mxu0 0.0
    %1369 = vmatpush1.msra.mxu0 0.0
    %1370 = vmatprep.subr.mxu0 0.0
    %1371 = vmatpush1.msra.mxu0 0.0
    %1372 = vmatprep.subr.mxu0 0.0
    %1373 = vmatpush1.msra.mxu0 0.0
    %1374 = vmatprep.subr.mxu0 0.0
    %1375 = vmatpush1.msra.mxu0 0.0
    %1376 = vmatprep.subr.mxu0 0.0
    %1377 = vmatpush1.msra.mxu0 0.0
    %1378 = vmatprep.subr.mxu0 0.0
    %1379 = vmatpush1.msra.mxu0 0.0
    %1380 = vmatprep.subr.mxu0 0.0
    %1381 = vmatpush1.msra.mxu0 0.0
    %1382 = vmatprep.subr.mxu0 0.0
    %1383 = vmatpush1.msra.mxu0 0.0
    %1384 = vmatprep.subr.mxu0 0.0
    %1385 = vmatpush1.msra.mxu0 0.0
    %1386 = vmatprep.subr.mxu0 0.0
    %1387 = vmatpush1.msra.mxu0 0.0
    %1388 = vmatprep.subr.mxu0 0.0
    %1389 = vmatpush1.msra.mxu0 0.0
    %1390 = vmatprep.subr.mxu0 0.0
    %1391 = vmatpush1.msra.mxu0 0.0
    %1392 = vmatprep.subr.mxu0 0.0
    %1393 = vmatpush1.msra.mxu0 0.0
    %1394 = vmatprep.subr.mxu0 0.0
    %1395 = vmatpush1.msra.mxu0 0.0
    %1396 = vmatprep.subr.mxu0 0.0
    %1397 = vmatpush1.msra.mxu0 0.0
    %1398 = vmatprep.subr.mxu0 0.0
    %1399 = vmatpush1.msra.mxu0 0.0
    %1400 = vmatprep.subr.mxu0 0.0
    %1401 = vmatpush1.msra.mxu0 0.0
    %1402 = vmatprep.subr.mxu0 0.0
    %1403 = vmatpush1.msra.mxu0 0.0
    %1404 = vmatprep.subr.mxu0 0.0
    %1405 = vmatpush1.msra.mxu0 0.0
    %1406 = vmatprep.subr.mxu0 0.0
    %1407 = vmatpush1.msra.mxu0 0.0
    %1408 = vmatprep.subr.mxu0 0.0
    %1409 = vmatpush1.msra.mxu0 0.0
    %1410 = vmatprep.subr.mxu0 0.0
    %1411 = vmatpush1.msra.mxu0 0.0
    %1412 = vmatprep.subr.mxu0 0.0
    %1413 = vmatpush1.msra.mxu0 0.0
    %1414 = vmatprep.subr.mxu0 0.0
    %1415 = vmatpush1.msra.mxu0 0.0
    %1416 = vmatprep.subr.mxu0 0.0
    %1417 = vmatpush1.msra.mxu0 0.0
    %1418 = vmatprep.subr.mxu0 0.0
    %1419 = vmatpush1.msra.mxu0 0.0
    %1420 = vmatprep.mubr.f32.mxu0 0.0
    %1421 = vmatmul.mubr.f32.gmra.mrb[0].mxu0 %v1354
    %v1422 = vpop.f32.mrb[0].mxu0
    %v1423 = vadd.f32 0.0, %v1422
    %v1424 = vpop.f32.mrb[0].mxu0
    %1425 = vdwg.mxu0
    %v1427 = vrot.slane %v1423, 6
    %v1429 = vadd.f32 %v228, %v1427
    %v1431 = vrot.slane %v1350, 6
    %1432 = vrot.lane.b32.xlu0 %v1431, 32
    %v1433 = vpop.permute.xlu0 %1432
    %v1434 = vsel %vm150, %v1433, 0
    %1436 = vmatprep.subr.mxu0 0.0
    %1437 = vmatpush1.msra.mxu0 %v67
    %1438 = vmatprep.subr.mxu0 0.0
    %1439 = vmatpush1.msra.mxu0 %v68
    %1440 = vmatprep.subr.mxu0 0.0
    %1441 = vmatpush1.msra.mxu0 %v69
    %1442 = vmatprep.subr.mxu0 0.0
    %1443 = vmatpush1.msra.mxu0 %v70
    %1444 = vmatprep.subr.mxu0 0.0
    %1445 = vmatpush1.msra.mxu0 0.0
    %1446 = vmatprep.subr.mxu0 0.0
    %1447 = vmatpush1.msra.mxu0 0.0
    %1448 = vmatprep.subr.mxu0 0.0
    %1449 = vmatpush1.msra.mxu0 0.0
    %1450 = vmatprep.subr.mxu0 0.0
    %1451 = vmatpush1.msra.mxu0 0.0
    %1452 = vmatprep.subr.mxu0 0.0
    %1453 = vmatpush1.msra.mxu0 0.0
    %1454 = vmatprep.subr.mxu0 0.0
    %1455 = vmatpush1.msra.mxu0 0.0
    %1456 = vmatprep.subr.mxu0 0.0
    %1457 = vmatpush1.msra.mxu0 0.0
    %1458 = vmatprep.subr.mxu0 0.0
    %1459 = vmatpush1.msra.mxu0 0.0
    %1460 = vmatprep.subr.mxu0 0.0
    %1461 = vmatpush1.msra.mxu0 0.0
    %1462 = vmatprep.subr.mxu0 0.0
    %1463 = vmatpush1.msra.mxu0 0.0
    %1464 = vmatprep.subr.mxu0 0.0
    %1465 = vmatpush1.msra.mxu0 0.0
    %1466 = vmatprep.subr.mxu0 0.0
    %1467 = vmatpush1.msra.mxu0 0.0
    %1468 = vmatprep.subr.mxu0 0.0
    %1469 = vmatpush1.msra.mxu0 0.0
    %1470 = vmatprep.subr.mxu0 0.0
    %1471 = vmatpush1.msra.mxu0 0.0
    %1472 = vmatprep.subr.mxu0 0.0
    %1473 = vmatpush1.msra.mxu0 0.0
    %1474 = vmatprep.subr.mxu0 0.0
    %1475 = vmatpush1.msra.mxu0 0.0
    %1476 = vmatprep.subr.mxu0 0.0
    %1477 = vmatpush1.msra.mxu0 0.0
    %1478 = vmatprep.subr.mxu0 0.0
    %1479 = vmatpush1.msra.mxu0 0.0
    %1480 = vmatprep.subr.mxu0 0.0
    %1481 = vmatpush1.msra.mxu0 0.0
    %1482 = vmatprep.subr.mxu0 0.0
    %1483 = vmatpush1.msra.mxu0 0.0
    %1484 = vmatprep.subr.mxu0 0.0
    %1485 = vmatpush1.msra.mxu0 0.0
    %1486 = vmatprep.subr.mxu0 0.0
    %1487 = vmatpush1.msra.mxu0 0.0
    %1488 = vmatprep.subr.mxu0 0.0
    %1489 = vmatpush1.msra.mxu0 0.0
    %1490 = vmatprep.subr.mxu0 0.0
    %1491 = vmatpush1.msra.mxu0 0.0
    %1492 = vmatprep.subr.mxu0 0.0
    %1493 = vmatpush1.msra.mxu0 0.0
    %1494 = vmatprep.subr.mxu0 0.0
    %1495 = vmatpush1.msra.mxu0 0.0
    %1496 = vmatprep.subr.mxu0 0.0
    %1497 = vmatpush1.msra.mxu0 0.0
    %1498 = vmatprep.subr.mxu0 0.0
    %1499 = vmatpush1.msra.mxu0 0.0
    %1500 = vmatprep.mubr.f32.mxu0 0.0
    %1501 = vmatmul.mubr.f32.gmra.mrb[0].mxu0 %v1434
    %v1502 = vpop.f32.mrb[0].mxu0
    %v1503 = vadd.f32 0.0, %v1502
    %v1504 = vpop.f32.mrb[0].mxu0
    %1505 = vdwg.mxu0
    %v1507 = vrot.slane %v1503, 4
    %v1509 = vadd.f32 %v224, %v1507
    %v1510 = vxor.u32 %v1429, 2147483648
    %v1511 = vmul.f32 %v1510, 1.442695
    %v1512 = vpow.pop %v1511
    %v1513 = vadd.f32 %v1512, 1.0
    %v1514 = vrcp.pop %v1513
    %v1515 = vmul.f32 1.0, %v1514
    %v1516 = vtanh.pop %v1429
    %v1518 = vrot.slane %v1317, 6
    %v1520 = vmul.f32 %v1515, %v1518
    %1522 = vrot.lane.b32.xlu0 %v1516, 64
    %v1523 = vpop.permute.xlu0 %1522
    %v1525 = vmul.f32 %v1515, %v1523
    %1527 = vrot.lane.b32.xlu0 %v1525, 32
    %v1528 = vpop.permute.xlu0 %1527
    %v1530 = vadd.f32 %v1520, %v1528
    %v1531 = vtanh.pop %v1530
    %1533 = vrot.lane.b32.xlu0 %v1531, 64
    %v1534 = vpop.permute.xlu0 %1533
    %v1536 = vmul.f32 %v1515, %v1534
    %v1537 = vxor.u32 %v1509, 2147483648
    %v1538 = vmul.f32 %v1537, 1.442695
    %v1539 = vpow.pop %v1538
    %v1540 = vadd.f32 %v1539, 1.0
    %v1541 = vrcp.pop %v1540
    %v1542 = vmul.f32 1.0, %v1541
    %v1543 = vtanh.pop %v1509
    %v1545 = vrot.slane %v1344, 2
    %v1547 = vmul.f32 %v1542, %v1545
    %1549 = vrot.lane.b32.xlu0 %v1543, 64
    %v1550 = vpop.permute.xlu0 %1549
    %v1552 = vmul.f32 %v1542, %v1550
    %1554 = vrot.lane.b32.xlu0 %v1552, 32
    %v1555 = vpop.permute.xlu0 %1554
    %v1557 = vadd.f32 %v1547, %v1555
    %v1558 = vtanh.pop %v1557
    %1560 = vrot.lane.b32.xlu0 %v1558, 64
    %v1561 = vpop.permute.xlu0 %1560
    %v1563 = vmul.f32 %v1542, %v1561
    %v1565 = vrot.slane %v1536, 2
    %1566 = vrot.lane.b32.xlu0 %v1565, 32
    %v1567 = vpop.permute.xlu0 %1566
    %v1568 = vsel %vm150, %v1567, 0
    %1570 = vmatprep.subr.mxu0 0.0
    %1571 = vmatpush1.msra.mxu0 %v63
    %1572 = vmatprep.subr.mxu0 0.0
    %1573 = vmatpush1.msra.mxu0 %v64
    %1574 = vmatprep.subr.mxu0 0.0
    %1575 = vmatpush1.msra.mxu0 %v65
    %1576 = vmatprep.subr.mxu0 0.0
    %1577 = vmatpush1.msra.mxu0 %v66
    %1578 = vmatprep.subr.mxu0 0.0
    %1579 = vmatpush1.msra.mxu0 0.0
    %1580 = vmatprep.subr.mxu0 0.0
    %1581 = vmatpush1.msra.mxu0 0.0
    %1582 = vmatprep.subr.mxu0 0.0
    %1583 = vmatpush1.msra.mxu0 0.0
    %1584 = vmatprep.subr.mxu0 0.0
    %1585 = vmatpush1.msra.mxu0 0.0
    %1586 = vmatprep.subr.mxu0 0.0
    %1587 = vmatpush1.msra.mxu0 0.0
    %1588 = vmatprep.subr.mxu0 0.0
    %1589 = vmatpush1.msra.mxu0 0.0
    %1590 = vmatprep.subr.mxu0 0.0
    %1591 = vmatpush1.msra.mxu0 0.0
    %1592 = vmatprep.subr.mxu0 0.0
    %1593 = vmatpush1.msra.mxu0 0.0
    %1594 = vmatprep.subr.mxu0 0.0
    %1595 = vmatpush1.msra.mxu0 0.0
    %1596 = vmatprep.subr.mxu0 0.0
    %1597 = vmatpush1.msra.mxu0 0.0
    %1598 = vmatprep.subr.mxu0 0.0
    %1599 = vmatpush1.msra.mxu0 0.0
    %1600 = vmatprep.subr.mxu0 0.0
    %1601 = vmatpush1.msra.mxu0 0.0
    %1602 = vmatprep.subr.mxu0 0.0
    %1603 = vmatpush1.msra.mxu0 0.0
    %1604 = vmatprep.subr.mxu0 0.0
    %1605 = vmatpush1.msra.mxu0 0.0
    %1606 = vmatprep.subr.mxu0 0.0
    %1607 = vmatpush1.msra.mxu0 0.0
    %1608 = vmatprep.subr.mxu0 0.0
    %1609 = vmatpush1.msra.mxu0 0.0
    %1610 = vmatprep.subr.mxu0 0.0
    %1611 = vmatpush1.msra.mxu0 0.0
    %1612 = vmatprep.subr.mxu0 0.0
    %1613 = vmatpush1.msra.mxu0 0.0
    %1614 = vmatprep.subr.mxu0 0.0
    %1615 = vmatpush1.msra.mxu0 0.0
    %1616 = vmatprep.subr.mxu0 0.0
    %1617 = vmatpush1.msra.mxu0 0.0
    %1618 = vmatprep.subr.mxu0 0.0
    %1619 = vmatpush1.msra.mxu0 0.0
    %1620 = vmatprep.subr.mxu0 0.0
    %1621 = vmatpush1.msra.mxu0 0.0
    %1622 = vmatprep.subr.mxu0 0.0
    %1623 = vmatpush1.msra.mxu0 0.0
    %1624 = vmatprep.subr.mxu0 0.0
    %1625 = vmatpush1.msra.mxu0 0.0
    %1626 = vmatprep.subr.mxu0 0.0
    %1627 = vmatpush1.msra.mxu0 0.0
    %1628 = vmatprep.subr.mxu0 0.0
    %1629 = vmatpush1.msra.mxu0 0.0
    %1630 = vmatprep.subr.mxu0 0.0
    %1631 = vmatpush1.msra.mxu0 0.0
    %1632 = vmatprep.subr.mxu0 0.0
    %1633 = vmatpush1.msra.mxu0 0.0
    %1634 = vmatprep.mubr.f32.mxu0 0.0
    %1635 = vmatmul.mubr.f32.gmra.mrb[0].mxu0 %v1568
    %v1636 = vpop.f32.mrb[0].mxu0
    %v1637 = vadd.f32 0.0, %v1636
    %v1638 = vpop.f32.mrb[0].mxu0
    %1639 = vdwg.mxu0
    %v1641 = vrot.slane %v1637, 4
    %v1643 = vadd.f32 %v228, %v1641
    %v1645 = vrot.slane %v1563, 4
    %1646 = vrot.lane.b32.xlu0 %v1645, 32
    %v1647 = vpop.permute.xlu0 %1646
    %v1648 = vsel %vm150, %v1647, 0
    %1650 = vmatprep.subr.mxu0 0.0
    %1651 = vmatpush1.msra.mxu0 %v67
    %1652 = vmatprep.subr.mxu0 0.0
    %1653 = vmatpush1.msra.mxu0 %v68
    %1654 = vmatprep.subr.mxu0 0.0
    %1655 = vmatpush1.msra.mxu0 %v69
    %1656 = vmatprep.subr.mxu0 0.0
    %1657 = vmatpush1.msra.mxu0 %v70
    %1658 = vmatprep.subr.mxu0 0.0
    %1659 = vmatpush1.msra.mxu0 0.0
    %1660 = vmatprep.subr.mxu0 0.0
    %1661 = vmatpush1.msra.mxu0 0.0
    %1662 = vmatprep.subr.mxu0 0.0
    %1663 = vmatpush1.msra.mxu0 0.0
    %1664 = vmatprep.subr.mxu0 0.0
    %1665 = vmatpush1.msra.mxu0 0.0
    %1666 = vmatprep.subr.mxu0 0.0
    %1667 = vmatpush1.msra.mxu0 0.0
    %1668 = vmatprep.subr.mxu0 0.0
    %1669 = vmatpush1.msra.mxu0 0.0
    %1670 = vmatprep.subr.mxu0 0.0
    %1671 = vmatpush1.msra.mxu0 0.0
    %1672 = vmatprep.subr.mxu0 0.0
    %1673 = vmatpush1.msra.mxu0 0.0
    %1674 = vmatprep.subr.mxu0 0.0
    %1675 = vmatpush1.msra.mxu0 0.0
    %1676 = vmatprep.subr.mxu0 0.0
    %1677 = vmatpush1.msra.mxu0 0.0
    %1678 = vmatprep.subr.mxu0 0.0
    %1679 = vmatpush1.msra.mxu0 0.0
    %1680 = vmatprep.subr.mxu0 0.0
    %1681 = vmatpush1.msra.mxu0 0.0
    %1682 = vmatprep.subr.mxu0 0.0
    %1683 = vmatpush1.msra.mxu0 0.0
    %1684 = vmatprep.subr.mxu0 0.0
    %1685 = vmatpush1.msra.mxu0 0.0
    %1686 = vmatprep.subr.mxu0 0.0
    %1687 = vmatpush1.msra.mxu0 0.0
    %1688 = vmatprep.subr.mxu0 0.0
    %1689 = vmatpush1.msra.mxu0 0.0
    %1690 = vmatprep.subr.mxu0 0.0
    %1691 = vmatpush1.msra.mxu0 0.0
    %1692 = vmatprep.subr.mxu0 0.0
    %1693 = vmatpush1.msra.mxu0 0.0
    %1694 = vmatprep.subr.mxu0 0.0
    %1695 = vmatpush1.msra.mxu0 0.0
    %1696 = vmatprep.subr.mxu0 0.0
    %1697 = vmatpush1.msra.mxu0 0.0
    %1698 = vmatprep.subr.mxu0 0.0
    %1699 = vmatpush1.msra.mxu0 0.0
    %1700 = vmatprep.subr.mxu0 0.0
    %1701 = vmatpush1.msra.mxu0 0.0
    %1702 = vmatprep.subr.mxu0 0.0
    %1703 = vmatpush1.msra.mxu0 0.0
    %1704 = vmatprep.subr.mxu0 0.0
    %1705 = vmatpush1.msra.mxu0 0.0
    %1706 = vmatprep.subr.mxu0 0.0
    %1707 = vmatpush1.msra.mxu0 0.0
    %1708 = vmatprep.subr.mxu0 0.0
    %1709 = vmatpush1.msra.mxu0 0.0
    %1710 = vmatprep.subr.mxu0 0.0
    %1711 = vmatpush1.msra.mxu0 0.0
    %1712 = vmatprep.subr.mxu0 0.0
    %1713 = vmatpush1.msra.mxu0 0.0
    %1714 = vmatprep.mubr.f32.mxu0 0.0
    %1715 = vmatmul.mubr.f32.gmra.mrb[0].mxu0 %v1648
    %v1716 = vpop.f32.mrb[0].mxu0
    %v1717 = vadd.f32 0.0, %v1716
    %v1718 = vpop.f32.mrb[0].mxu0
    %1719 = vdwg.mxu0
    %v1721 = vrot.slane %v1717, 6
    %v1723 = vadd.f32 %v224, %v1721
    %v1724 = vxor.u32 %v1643, 2147483648
    %v1725 = vmul.f32 %v1724, 1.442695
    %v1726 = vpow.pop %v1725
    %v1727 = vadd.f32 %v1726, 1.0
    %v1728 = vrcp.pop %v1727
    %v1729 = vmul.f32 1.0, %v1728
    %v1730 = vtanh.pop %v1643
    %v1732 = vrot.slane %v1530, 6
    %v1734 = vmul.f32 %v1729, %v1732
    %1736 = vrot.lane.b32.xlu0 %v1730, 64
    %v1737 = vpop.permute.xlu0 %1736
    %v1739 = vmul.f32 %v1729, %v1737
    %1741 = vrot.lane.b32.xlu0 %v1739, 32
    %v1742 = vpop.permute.xlu0 %1741
    %v1744 = vadd.f32 %v1734, %v1742
    %v1745 = vtanh.pop %v1744
    %1747 = vrot.lane.b32.xlu0 %v1745, 64
    %v1748 = vpop.permute.xlu0 %1747
    %v1750 = vmul.f32 %v1729, %v1748
    %v1751 = vxor.u32 %v1723, 2147483648
    %v1752 = vmul.f32 %v1751, 1.442695
    %v1753 = vpow.pop %v1752
    %v1754 = vadd.f32 %v1753, 1.0
    %v1755 = vrcp.pop %v1754
    %v1756 = vmul.f32 1.0, %v1755
    %v1757 = vtanh.pop %v1723
    %v1759 = vrot.slane %v1557, 2
    %v1761 = vmul.f32 %v1756, %v1759
    %1763 = vrot.lane.b32.xlu0 %v1757, 64
    %v1764 = vpop.permute.xlu0 %1763
    %v1766 = vmul.f32 %v1756, %v1764
    %1768 = vrot.lane.b32.xlu0 %v1766, 32
    %v1769 = vpop.permute.xlu0 %1768
    %v1771 = vadd.f32 %v1761, %v1769
    %v1772 = vtanh.pop %v1771
    %1774 = vrot.lane.b32.xlu0 %v1772, 64
    %v1775 = vpop.permute.xlu0 %1774
    %v1777 = vmul.f32 %v1756, %v1775
    %v1779 = vrot.slane %v1750, 4
    %1780 = vrot.lane.b32.xlu0 %v1779, 32
    %v1781 = vpop.permute.xlu0 %1780
    %v1782 = vsel %vm150, %v1781, 0
    %1784 = vmatprep.subr.mxu0 0.0
    %1785 = vmatpush1.msra.mxu0 %v63
    %1786 = vmatprep.subr.mxu0 0.0
    %1787 = vmatpush1.msra.mxu0 %v64
    %1788 = vmatprep.subr.mxu0 0.0
    %1789 = vmatpush1.msra.mxu0 %v65
    %1790 = vmatprep.subr.mxu0 0.0
    %1791 = vmatpush1.msra.mxu0 %v66
    %1792 = vmatprep.subr.mxu0 0.0
    %1793 = vmatpush1.msra.mxu0 0.0
    %1794 = vmatprep.subr.mxu0 0.0
    %1795 = vmatpush1.msra.mxu0 0.0
    %1796 = vmatprep.subr.mxu0 0.0
    %1797 = vmatpush1.msra.mxu0 0.0
    %1798 = vmatprep.subr.mxu0 0.0
    %1799 = vmatpush1.msra.mxu0 0.0
    %1800 = vmatprep.subr.mxu0 0.0
    %1801 = vmatpush1.msra.mxu0 0.0
    %1802 = vmatprep.subr.mxu0 0.0
    %1803 = vmatpush1.msra.mxu0 0.0
    %1804 = vmatprep.subr.mxu0 0.0
    %1805 = vmatpush1.msra.mxu0 0.0
    %1806 = vmatprep.subr.mxu0 0.0
    %1807 = vmatpush1.msra.mxu0 0.0
    %1808 = vmatprep.subr.mxu0 0.0
    %1809 = vmatpush1.msra.mxu0 0.0
    %1810 = vmatprep.subr.mxu0 0.0
    %1811 = vmatpush1.msra.mxu0 0.0
    %1812 = vmatprep.subr.mxu0 0.0
    %1813 = vmatpush1.msra.mxu0 0.0
    %1814 = vmatprep.subr.mxu0 0.0
    %1815 = vmatpush1.msra.mxu0 0.0
    %1816 = vmatprep.subr.mxu0 0.0
    %1817 = vmatpush1.msra.mxu0 0.0
    %1818 = vmatprep.subr.mxu0 0.0
    %1819 = vmatpush1.msra.mxu0 0.0
    %1820 = vmatprep.subr.mxu0 0.0
    %1821 = vmatpush1.msra.mxu0 0.0
    %1822 = vmatprep.subr.mxu0 0.0
    %1823 = vmatpush1.msra.mxu0 0.0
    %1824 = vmatprep.subr.mxu0 0.0
    %1825 = vmatpush1.msra.mxu0 0.0
    %1826 = vmatprep.subr.mxu0 0.0
    %1827 = vmatpush1.msra.mxu0 0.0
    %1828 = vmatprep.subr.mxu0 0.0
    %1829 = vmatpush1.msra.mxu0 0.0
    %1830 = vmatprep.subr.mxu0 0.0
    %1831 = vmatpush1.msra.mxu0 0.0
    %1832 = vmatprep.subr.mxu0 0.0
    %1833 = vmatpush1.msra.mxu0 0.0
    %1834 = vmatprep.subr.mxu0 0.0
    %1835 = vmatpush1.msra.mxu0 0.0
    %1836 = vmatprep.subr.mxu0 0.0
    %1837 = vmatpush1.msra.mxu0 0.0
    %1838 = vmatprep.subr.mxu0 0.0
    %1839 = vmatpush1.msra.mxu0 0.0
    %1840 = vmatprep.subr.mxu0 0.0
    %1841 = vmatpush1.msra.mxu0 0.0
    %1842 = vmatprep.subr.mxu0 0.0
    %1843 = vmatpush1.msra.mxu0 0.0
    %1844 = vmatprep.subr.mxu0 0.0
    %1845 = vmatpush1.msra.mxu0 0.0
    %1846 = vmatprep.subr.mxu0 0.0
    %1847 = vmatpush1.msra.mxu0 0.0
    %1848 = vmatprep.mubr.f32.mxu0 0.0
    %1849 = vmatmul.mubr.f32.gmra.mrb[0].mxu0 %v1782
    %v1850 = vpop.f32.mrb[0].mxu0
    %v1851 = vadd.f32 0.0, %v1850
    %v1852 = vpop.f32.mrb[0].mxu0
    %1853 = vdwg.mxu0
    %v1855 = vrot.slane %v1851, 2
    %v1857 = vadd.f32 %v228, %v1855
    %v1859 = vrot.slane %v1777, 2
    %1860 = vrot.lane.b32.xlu0 %v1859, 32
    %v1861 = vpop.permute.xlu0 %1860
    %v1862 = vsel %vm150, %v1861, 0
    %1864 = vmatprep.subr.mxu0 0.0
    %1865 = vmatpush1.msra.mxu0 %v67
    %1866 = vmatprep.subr.mxu0 0.0
    %1867 = vmatpush1.msra.mxu0 %v68
    %1868 = vmatprep.subr.mxu0 0.0
    %1869 = vmatpush1.msra.mxu0 %v69
    %1870 = vmatprep.subr.mxu0 0.0
    %1871 = vmatpush1.msra.mxu0 %v70
    %1872 = vmatprep.subr.mxu0 0.0
    %1873 = vmatpush1.msra.mxu0 0.0
    %1874 = vmatprep.subr.mxu0 0.0
    %1875 = vmatpush1.msra.mxu0 0.0
    %1876 = vmatprep.subr.mxu0 0.0
    %1877 = vmatpush1.msra.mxu0 0.0
    %1878 = vmatprep.subr.mxu0 0.0
    %1879 = vmatpush1.msra.mxu0 0.0
    %1880 = vmatprep.subr.mxu0 0.0
    %1881 = vmatpush1.msra.mxu0 0.0
    %1882 = vmatprep.subr.mxu0 0.0
    %1883 = vmatpush1.msra.mxu0 0.0
    %1884 = vmatprep.subr.mxu0 0.0
    %1885 = vmatpush1.msra.mxu0 0.0
    %1886 = vmatprep.subr.mxu0 0.0
    %1887 = vmatpush1.msra.mxu0 0.0
    %1888 = vmatprep.subr.mxu0 0.0
    %1889 = vmatpush1.msra.mxu0 0.0
    %1890 = vmatprep.subr.mxu0 0.0
    %1891 = vmatpush1.msra.mxu0 0.0
    %1892 = vmatprep.subr.mxu0 0.0
    %1893 = vmatpush1.msra.mxu0 0.0
    %1894 = vmatprep.subr.mxu0 0.0
    %1895 = vmatpush1.msra.mxu0 0.0
    %1896 = vmatprep.subr.mxu0 0.0
    %1897 = vmatpush1.msra.mxu0 0.0
    %1898 = vmatprep.subr.mxu0 0.0
    %1899 = vmatpush1.msra.mxu0 0.0
    %1900 = vmatprep.subr.mxu0 0.0
    %1901 = vmatpush1.msra.mxu0 0.0
    %1902 = vmatprep.subr.mxu0 0.0
    %1903 = vmatpush1.msra.mxu0 0.0
    %1904 = vmatprep.subr.mxu0 0.0
    %1905 = vmatpush1.msra.mxu0 0.0
    %1906 = vmatprep.subr.mxu0 0.0
    %1907 = vmatpush1.msra.mxu0 0.0
    %1908 = vmatprep.subr.mxu0 0.0
    %1909 = vmatpush1.msra.mxu0 0.0
    %1910 = vmatprep.subr.mxu0 0.0
    %1911 = vmatpush1.msra.mxu0 0.0
    %1912 = vmatprep.subr.mxu0 0.0
    %1913 = vmatpush1.msra.mxu0 0.0
    %1914 = vmatprep.subr.mxu0 0.0
    %1915 = vmatpush1.msra.mxu0 0.0
    %1916 = vmatprep.subr.mxu0 0.0
    %1917 = vmatpush1.msra.mxu0 0.0
    %1918 = vmatprep.subr.mxu0 0.0
    %1919 = vmatpush1.msra.mxu0 0.0
    %1920 = vmatprep.subr.mxu0 0.0
    %1921 = vmatpush1.msra.mxu0 0.0
    %1922 = vmatprep.subr.mxu0 0.0
    %1923 = vmatpush1.msra.mxu0 0.0
    %1924 = vmatprep.subr.mxu0 0.0
    %1925 = vmatpush1.msra.mxu0 0.0
    %1926 = vmatprep.subr.mxu0 0.0
    %1927 = vmatpush1.msra.mxu0 0.0
    %1928 = vmatprep.mubr.f32.mxu0 0.0
    %1929 = vmatmul.mubr.f32.gmra.mrb[0].mxu0 %v1862
    %v1930 = vpop.f32.mrb[0].mxu0
    %v1931 = vadd.f32 0.0, %v1930
    %v1932 = vpop.f32.mrb[0].mxu0
    %1933 = vdwg.mxu0
    %v1934 = vadd.f32 %v224, %v1931
    %v1935 = vxor.u32 %v1857, 2147483648
    %v1936 = vmul.f32 %v1935, 1.442695
    %v1937 = vpow.pop %v1936
    %v1938 = vadd.f32 %v1937, 1.0
    %v1939 = vrcp.pop %v1938
    %v1940 = vmul.f32 1.0, %v1939
    %v1941 = vtanh.pop %v1857
    %v1943 = vrot.slane %v1744, 6
    %v1945 = vmul.f32 %v1940, %v1943
    %1947 = vrot.lane.b32.xlu0 %v1941, 64
    %v1948 = vpop.permute.xlu0 %1947
    %v1950 = vmul.f32 %v1940, %v1948
    %1952 = vrot.lane.b32.xlu0 %v1950, 32
    %v1953 = vpop.permute.xlu0 %1952
    %v1955 = vadd.f32 %v1945, %v1953
    %v1956 = vtanh.pop %v1955
    %1958 = vrot.lane.b32.xlu0 %v1956, 64
    %v1959 = vpop.permute.xlu0 %1958
    %v1961 = vmul.f32 %v1940, %v1959
    %v1962 = vxor.u32 %v1934, 2147483648
    %v1963 = vmul.f32 %v1962, 1.442695
    %v1964 = vpow.pop %v1963
    %v1965 = vadd.f32 %v1964, 1.0
    %v1966 = vrcp.pop %v1965
    %v1967 = vmul.f32 1.0, %v1966
    %v1968 = vtanh.pop %v1934
    %v1970 = vrot.slane %v1771, 2
    %v1972 = vmul.f32 %v1967, %v1970
    %1974 = vrot.lane.b32.xlu0 %v1968, 64
    %v1975 = vpop.permute.xlu0 %1974
    %v1977 = vmul.f32 %v1967, %v1975
    %1979 = vrot.lane.b32.xlu0 %v1977, 32
    %v1980 = vpop.permute.xlu0 %1979
    %v1982 = vadd.f32 %v1972, %v1980
    %v1983 = vtanh.pop %v1982
    %1985 = vrot.lane.b32.xlu0 %v1983, 64
    %v1986 = vpop.permute.xlu0 %1985
    %v1988 = vmul.f32 %v1967, %v1986
    %vm1989 = vcmask 1041408
    %v1990 = vsel %vm1989, %v478, %v688
    %vm1991 = vcmask 1043456
    %v1992 = vsel %vm1991, %v1990, %v902
    %vm1993 = vcmask 1045504
    %v1994 = vsel %vm1993, %v1992, %v1113
    %v1995 = vsel %vm1989, %v1323, %v1536
    %v1996 = vsel %vm1991, %v1995, %v1750
    %v1997 = vsel %vm1993, %v1996, %v1961
    %v1998 = vsel %vm1989, %v1988, %v1777
    %v1999 = vsel %vm1991, %v1998, %v1563
    %v2000 = vsel %vm1993, %v1999, %v1350
    %v2001 = vsel %vm1989, %v1140, %v929
    %v2002 = vsel %vm1991, %v2001, %v715
    %v2003 = vsel %vm1993, %v2002, %v502
    %2006 = vrot.lane.b32.xlu0 %v2000, 32
    %v2007 = vpop.permute.xlu0 %2006
    %2008 = vrot.lane.b32.xlu0 %v2003, 32
    %v2009 = vpop.permute.xlu0 %2008
    %v2010 = vsel %vm150, %v2007, 0
    %v2012 = vsel %vm150, %v2009, 0
    %2014 = vmatprep.subr.mxu0 0.0
    %2015 = vmatpush1.msra.mxu0 %v75
    %2016 = vmatprep.subr.mxu0 0.0
    %2017 = vmatpush1.msra.mxu0 %v76
    %2018 = vmatprep.subr.mxu0 0.0
    %2019 = vmatpush1.msra.mxu0 %v77
    %2020 = vmatprep.subr.mxu0 0.0
    %2021 = vmatpush1.msra.mxu0 %v78
    %2022 = vmatprep.subr.mxu0 0.0
    %2023 = vmatpush1.msra.mxu0 0.0
    %2024 = vmatprep.subr.mxu0 0.0
    %2025 = vmatpush1.msra.mxu0 0.0
    %2026 = vmatprep.subr.mxu0 0.0
    %2027 = vmatpush1.msra.mxu0 0.0
    %2028 = vmatprep.subr.mxu0 0.0
    %2029 = vmatpush1.msra.mxu0 0.0
    %2030 = vmatprep.subr.mxu0 0.0
    %2031 = vmatpush1.msra.mxu0 0.0
    %2032 = vmatprep.subr.mxu0 0.0
    %2033 = vmatpush1.msra.mxu0 0.0
    %2034 = vmatprep.subr.mxu0 0.0
    %2035 = vmatpush1.msra.mxu0 0.0
    %2036 = vmatprep.subr.mxu0 0.0
    %2037 = vmatpush1.msra.mxu0 0.0
    %2038 = vmatprep.subr.mxu0 0.0
    %2039 = vmatpush1.msra.mxu0 0.0
    %2040 = vmatprep.subr.mxu0 0.0
    %2041 = vmatpush1.msra.mxu0 0.0
    %2042 = vmatprep.subr.mxu0 0.0
    %2043 = vmatpush1.msra.mxu0 0.0
    %2044 = vmatprep.subr.mxu0 0.0
    %2045 = vmatpush1.msra.mxu0 0.0
    %2046 = vmatprep.subr.mxu0 0.0
    %2047 = vmatpush1.msra.mxu0 0.0
    %2048 = vmatprep.subr.mxu0 0.0
    %2049 = vmatpush1.msra.mxu0 0.0
    %2050 = vmatprep.subr.mxu0 0.0
    %2051 = vmatpush1.msra.mxu0 0.0
    %2052 = vmatprep.subr.mxu0 0.0
    %2053 = vmatpush1.msra.mxu0 0.0
    %2054 = vmatprep.subr.mxu0 0.0
    %2055 = vmatpush1.msra.mxu0 0.0
    %2056 = vmatprep.subr.mxu0 0.0
    %2057 = vmatpush1.msra.mxu0 0.0
    %2058 = vmatprep.subr.mxu0 0.0
    %2059 = vmatpush1.msra.mxu0 0.0
    %2060 = vmatprep.subr.mxu0 0.0
    %2061 = vmatpush1.msra.mxu0 0.0
    %2062 = vmatprep.subr.mxu0 0.0
    %2063 = vmatpush1.msra.mxu0 0.0
    %2064 = vmatprep.subr.mxu0 0.0
    %2065 = vmatpush1.msra.mxu0 0.0
    %2066 = vmatprep.subr.mxu0 0.0
    %2067 = vmatpush1.msra.mxu0 0.0
    %2068 = vmatprep.subr.mxu0 0.0
    %2069 = vmatpush1.msra.mxu0 0.0
    %2070 = vmatprep.subr.mxu0 0.0
    %2071 = vmatpush1.msra.mxu0 0.0
    %2072 = vmatprep.subr.mxu0 0.0
    %2073 = vmatpush1.msra.mxu0 0.0
    %2074 = vmatprep.subr.mxu0 0.0
    %2075 = vmatpush1.msra.mxu0 0.0
    %2076 = vmatprep.subr.mxu0 0.0
    %2077 = vmatpush1.msra.mxu0 0.0
    %2078 = vmatprep.mubr.f32.mxu0 0.0
    %2079 = vmatmul.mubr.f32.gmra.mrb[0].mxu0 %v2010
    %v2080 = vpop.f32.mrb[0].mxu0
    %v2081 = vadd.f32 0.0, %v2080
    %v2082 = vpop.f32.mrb[0].mxu0
    %2083 = vmatprep.mubr.f32.mxu0 0.0
    %2084 = vmatmul.mubr.f32.gmra.mrb[0].mxu0 %v2012
    %v2085 = vpop.f32.mrb[0].mxu0
    %v2086 = vadd.f32 0.0, %v2085
    %v2087 = vpop.f32.mrb[0].mxu0
    %2088 = vdwg.mxu0
    %2091 = vrot.lane.b32.xlu0 %v1994, 32
    %v2092 = vpop.permute.xlu0 %2091
    %2093 = vrot.lane.b32.xlu0 %v1997, 32
    %v2094 = vpop.permute.xlu0 %2093
    %v2095 = vsel %vm150, %v2092, 0
    %v2097 = vsel %vm150, %v2094, 0
    %2099 = vmatprep.subr.mxu0 0.0
    %2100 = vmatpush1.msra.mxu0 %v71
    %2101 = vmatprep.subr.mxu0 0.0
    %2102 = vmatpush1.msra.mxu0 %v72
    %2103 = vmatprep.subr.mxu0 0.0
    %2104 = vmatpush1.msra.mxu0 %v73
    %2105 = vmatprep.subr.mxu0 0.0
    %2106 = vmatpush1.msra.mxu0 %v74
    %2107 = vmatprep.subr.mxu0 0.0
    %2108 = vmatpush1.msra.mxu0 0.0
    %2109 = vmatprep.subr.mxu0 0.0
    %2110 = vmatpush1.msra.mxu0 0.0
    %2111 = vmatprep.subr.mxu0 0.0
    %2112 = vmatpush1.msra.mxu0 0.0
    %2113 = vmatprep.subr.mxu0 0.0
    %2114 = vmatpush1.msra.mxu0 0.0
    %2115 = vmatprep.subr.mxu0 0.0
    %2116 = vmatpush1.msra.mxu0 0.0
    %2117 = vmatprep.subr.mxu0 0.0
    %2118 = vmatpush1.msra.mxu0 0.0
    %2119 = vmatprep.subr.mxu0 0.0
    %2120 = vmatpush1.msra.mxu0 0.0
    %2121 = vmatprep.subr.mxu0 0.0
    %2122 = vmatpush1.msra.mxu0 0.0
    %2123 = vmatprep.subr.mxu0 0.0
    %2124 = vmatpush1.msra.mxu0 0.0
    %2125 = vmatprep.subr.mxu0 0.0
    %2126 = vmatpush1.msra.mxu0 0.0
    %2127 = vmatprep.subr.mxu0 0.0
    %2128 = vmatpush1.msra.mxu0 0.0
    %2129 = vmatprep.subr.mxu0 0.0
    %2130 = vmatpush1.msra.mxu0 0.0
    %2131 = vmatprep.subr.mxu0 0.0
    %2132 = vmatpush1.msra.mxu0 0.0
    %2133 = vmatprep.subr.mxu0 0.0
    %2134 = vmatpush1.msra.mxu0 0.0
    %2135 = vmatprep.subr.mxu0 0.0
    %2136 = vmatpush1.msra.mxu0 0.0
    %2137 = vmatprep.subr.mxu0 0.0
    %2138 = vmatpush1.msra.mxu0 0.0
    %2139 = vmatprep.subr.mxu0 0.0
    %2140 = vmatpush1.msra.mxu0 0.0
    %2141 = vmatprep.subr.mxu0 0.0
    %2142 = vmatpush1.msra.mxu0 0.0
    %2143 = vmatprep.subr.mxu0 0.0
    %2144 = vmatpush1.msra.mxu0 0.0
    %2145 = vmatprep.subr.mxu0 0.0
    %2146 = vmatpush1.msra.mxu0 0.0
    %2147 = vmatprep.subr.mxu0 0.0
    %2148 = vmatpush1.msra.mxu0 0.0
    %2149 = vmatprep.subr.mxu0 0.0
    %2150 = vmatpush1.msra.mxu0 0.0
    %2151 = vmatprep.subr.mxu0 0.0
    %2152 = vmatpush1.msra.mxu0 0.0
    %2153 = vmatprep.subr.mxu0 0.0
    %2154 = vmatpush1.msra.mxu0 0.0
    %2155 = vmatprep.subr.mxu0 0.0
    %2156 = vmatpush1.msra.mxu0 0.0
    %2157 = vmatprep.subr.mxu0 0.0
    %2158 = vmatpush1.msra.mxu0 0.0
    %2159 = vmatprep.subr.mxu0 0.0
    %2160 = vmatpush1.msra.mxu0 0.0
    %2161 = vmatprep.subr.mxu0 0.0
    %2162 = vmatpush1.msra.mxu0 0.0
    %2163 = vmatprep.mubr.f32.mxu0 0.0
    %2164 = vmatmul.mubr.f32.gmra.mrb[0].mxu0 %v2095
    %v2165 = vpop.f32.mrb[0].mxu0
    %v2166 = vadd.f32 %v2081, %v2165
    %v2167 = vpop.f32.mrb[0].mxu0
    %2168 = vmatprep.mubr.f32.mxu0 0.0
    %2169 = vmatmul.mubr.f32.gmra.mrb[0].mxu0 %v2097
    %v2170 = vpop.f32.mrb[0].mxu0
    %v2171 = vadd.f32 %v2086, %v2170
    %v2172 = vpop.f32.mrb[0].mxu0
    %2173 = vdwg.mxu0
    %v2174 = vadd.f32 %v2166, %v299
    %v2175 = vadd.f32 %v2171, %v304
    %v2176 = vtanh.pop %v2174
    %v2177 = vtanh.pop %v2175
    %v2180 = vcombine.high %v2176, %v2176
    %v2182 = vunpack.c.l.s4 1983009808
    %v2183 = vunpack.c.0.s8 %v2182
    %v2184 = vlaneseq
    %v2185 = vshrl.u32 %v2184, 7
    %v2186 = vsub.s32 %v2183, %v2185
    %v2187 = vrot.slane %v2176, %v2186
    %v2189 = vunpack.c.l.s4 1983009808
    %v2190 = vunpack.c.0.s8 %v2189
    %v2191 = vlaneseq
    %v2192 = vshrl.u32 %v2191, 7
    %v2193 = vsub.s32 %v2190, %v2192
    %v2194 = vrot.slane %v2180, %v2193
    %v2195 = vcombine.high %v2187, %v2187
    %v2196 = vcombine.high %v2194, %v2194
    %v2197 = vcombine.high %v2177, %v2177
    %v2199 = vunpack.c.l.s4 1983009808
    %v2200 = vunpack.c.0.s8 %v2199
    %v2201 = vlaneseq
    %v2202 = vshrl.u32 %v2201, 7
    %v2203 = vsub.s32 %v2200, %v2202
    %v2204 = vrot.slane %v2177, %v2203
    %v2206 = vunpack.c.l.s4 1983009808
    %v2207 = vunpack.c.0.s8 %v2206
    %v2208 = vlaneseq
    %v2209 = vshrl.u32 %v2208, 7
    %v2210 = vsub.s32 %v2207, %v2209
    %v2211 = vrot.slane %v2197, %v2210
    %v2212 = vcombine.high %v2204, %v2204
    %v2213 = vcombine.high %v2211, %v2211
    %vm2222 = vcmask 254976
    %v2223 = vsel %vm2222, %v2187, -inf
    %v2224 = vsel %vm2222, %v2195, -inf
    %v2225 = vsel %vm2222, %v2194, -inf
    %v2226 = vsel %vm2222, %v2196, -inf
    %v2227 = vsel %vm2222, %v2204, -inf
    %v2228 = vmax.f32 %v2223, %v2227
    %v2229 = vsel %vm2222, %v2212, -inf
    %v2230 = vmax.f32 %v2224, %v2229
    %v2231 = vsel %vm2222, %v2211, -inf
    %v2232 = vmax.f32 %v2225, %v2231
    %v2233 = vsel %vm2222, %v2213, -inf
    %v2234 = vmax.f32 %v2226, %v2233
    %v2235 = vmax.f32 %v2228, %v2230
    %v2236 = vmax.f32 %v2232, %v2234
    %v2237 = vmax.f32 %v2235, %v2236
    %v2238 = vlaneseq
    %v2239 = vshrl.u32 %v2238, 7
    %v2240 = vsub.s32 0, %v2239
    %v2241 = vrot.slane %v83, %v2240
    %v2243 = vsel %vm150, %v2237, 0
    %2245 = vmatprep.subr.mxu0 0.0
    %2246 = vmatpush1.msra.mxu0 %v79
    %2247 = vmatprep.subr.mxu0 0.0
    %2248 = vmatpush1.msra.mxu0 %v80
    %2249 = vmatprep.subr.mxu0 0.0
    %2250 = vmatpush1.msra.mxu0 %v81
    %2251 = vmatprep.subr.mxu0 0.0
    %2252 = vmatpush1.msra.mxu0 %v82
    %2253 = vmatprep.subr.mxu0 0.0
    %2254 = vmatpush1.msra.mxu0 0.0
    %2255 = vmatprep.subr.mxu0 0.0
    %2256 = vmatpush1.msra.mxu0 0.0
    %2257 = vmatprep.subr.mxu0 0.0
    %2258 = vmatpush1.msra.mxu0 0.0
    %2259 = vmatprep.subr.mxu0 0.0
    %2260 = vmatpush1.msra.mxu0 0.0
    %2261 = vmatprep.subr.mxu0 0.0
    %2262 = vmatpush1.msra.mxu0 0.0
    %2263 = vmatprep.subr.mxu0 0.0
    %2264 = vmatpush1.msra.mxu0 0.0
    %2265 = vmatprep.subr.mxu0 0.0
    %2266 = vmatpush1.msra.mxu0 0.0
    %2267 = vmatprep.subr.mxu0 0.0
    %2268 = vmatpush1.msra.mxu0 0.0
    %2269 = vmatprep.subr.mxu0 0.0
    %2270 = vmatpush1.msra.mxu0 0.0
    %2271 = vmatprep.subr.mxu0 0.0
    %2272 = vmatpush1.msra.mxu0 0.0
    %2273 = vmatprep.subr.mxu0 0.0
    %2274 = vmatpush1.msra.mxu0 0.0
    %2275 = vmatprep.subr.mxu0 0.0
    %2276 = vmatpush1.msra.mxu0 0.0
    %2277 = vmatprep.subr.mxu0 0.0
    %2278 = vmatpush1.msra.mxu0 0.0
    %2279 = vmatprep.subr.mxu0 0.0
    %2280 = vmatpush1.msra.mxu0 0.0
    %2281 = vmatprep.subr.mxu0 0.0
    %2282 = vmatpush1.msra.mxu0 0.0
    %2283 = vmatprep.subr.mxu0 0.0
    %2284 = vmatpush1.msra.mxu0 0.0
    %2285 = vmatprep.subr.mxu0 0.0
    %2286 = vmatpush1.msra.mxu0 0.0
    %2287 = vmatprep.subr.mxu0 0.0
    %2288 = vmatpush1.msra.mxu0 0.0
    %2289 = vmatprep.subr.mxu0 0.0
    %2290 = vmatpush1.msra.mxu0 0.0
    %2291 = vmatprep.subr.mxu0 0.0
    %2292 = vmatpush1.msra.mxu0 0.0
    %2293 = vmatprep.subr.mxu0 0.0
    %2294 = vmatpush1.msra.mxu0 0.0
    %2295 = vmatprep.subr.mxu0 0.0
    %2296 = vmatpush1.msra.mxu0 0.0
    %2297 = vmatprep.subr.mxu0 0.0
    %2298 = vmatpush1.msra.mxu0 0.0
    %2299 = vmatprep.subr.mxu0 0.0
    %2300 = vmatpush1.msra.mxu0 0.0
    %2301 = vmatprep.subr.mxu0 0.0
    %2302 = vmatpush1.msra.mxu0 0.0
    %2303 = vmatprep.subr.mxu0 0.0
    %2304 = vmatpush1.msra.mxu0 0.0
    %2305 = vmatprep.subr.mxu0 0.0
    %2306 = vmatpush1.msra.mxu0 0.0
    %2307 = vmatprep.subr.mxu0 0.0
    %2308 = vmatpush1.msra.mxu0 0.0
    %2309 = vmatprep.mubr.f32.mxu0 0.0
    %2310 = vmatmul.mubr.f32.gmra.mrb[0].mxu0 %v2243
    %v2311 = vpop.f32.mrb[0].mxu0
    %v2312 = vadd.f32 %v2241, %v2311
    %v2313 = vpop.f32.mrb[0].mxu0
    %2314 = vdwg.mxu0
    %vm2315 = vcmask 33792
    %v2316 = vsel %vm2315, %v2312, -inf
    %2317 = vmax.xlane.f32.xlu0 %v2316
    %v2318 = vpop.xlane.xlu0 %2317
    %v2319 = vsub.f32 %v2312, %v2318
    %v2320 = vmul.f32 %v2319, 1.442695
    %v2321 = vpow.pop %v2320
    %v2322 = vsel %vm2315, %v2321, 0.0
    %2323 = vadd.xlane.f32.xlu0 %v2322
    %v2324 = vpop.xlane.xlu0 %2323
    %v2325 = vlog2.pop %v2324
    %v2326 = vmul.f32 %v2325, 0.6931472
    %v2327 = vsub.f32 %v2319, %v2326
    %2328 = vst.msk [vmem:[#allocation7] sm:$0x3] %vm2315, %v2327
    // Predicated region
    $region30: #{tpu_custom_call.1} parent=1 // pred_check
      _
    $region31: #{tpu_custom_call.1} parent=1 // pred_check_branch
      %2330 = sbr.rel (0) target = $region33
    $region32: #{tpu_custom_call.1} parent=1 // pred_region
      %s2332 = ssub.s32 32, 32
      %2333 = vsyncadd [#allocation4], %s2332
      %s2335 = sshll.u32 [#allocation7], 4
      %s2336 = int_to_ptr.vmem [resolvable:$true] %s2335
      %2338 = dma.vmem_to_hbm [thread:$0]  %s2336, 32, %s5, [#allocation4]
    $region33: #{tpu_custom_call.1} parent=1 // pred_fallthru
      _
    // Predicated region
    $region34: #{tpu_custom_call.1} parent=1 // pred_check
      _
    $region35: #{tpu_custom_call.1} parent=1 // pred_check_branch
      %2340 = sbr.rel (0) target = $region37
    $region36: #{tpu_custom_call.1} parent=1 // pred_region
      %2341 = dma.done [#allocation4], 32
    $region37: #{tpu_custom_call.1} parent=1 // pred_fallthru
      _
    %2342 = vsyncpa [#allocation3], 1
    %2343 = vsyncpa [#allocation6], 1
    %2344 = vsyncpa [#allocation4], 1

</llo_original>
